<compile_context>
chip_gen: v6e
topology: v6e:2x2x1
jax: 0.10.0
libtpu: 0.0.40
codegen_flags: <defaults>
</compile_context>

<pallas_src>
import functools
import math

import jax
import jax.numpy as jnp
from jax.experimental import pallas as pl
from jax.experimental.pallas import tpu as pltpu


def _round_up(n, m):
    return ((n + m - 1) // m) * m


def _pad_gate_cols(w, h, hp):
    """Pad a (..., 4*h) gate-concatenated [i|f|g|o] axis to (..., 4*hp)."""
    lead = w.shape[:-1]
    w4 = w.reshape(lead + (4, h))
    pad = [(0, 0)] * len(lead) + [(0, 0), (0, hp - h)]
    return jnp.pad(w4, pad).reshape(lead + (4 * hp,))


def _nbytes(shape, dtype):
    return math.prod(shape) * jnp.dtype(dtype).itemsize


def _vmem_limit(resident_bytes):
    """Scoped-VMEM budget from actual resident bytes (+headroom), clamped."""
    return int(min(max(int(resident_bytes * 1.5) + (4 << 20), 16 << 20), 96 << 20))


# --------------------------------------------------------------------------
# Kernel 1: LSTM recurrence (single invocation, everything VMEM-resident)
# --------------------------------------------------------------------------
def lstm_recurrence_kernel(x_ref, wih_ref, whh_ref, bias_ref, hs_ref, gx_sc,
                           *, T, Bp, Hp, unroll):
    """x_ref   : (T*Bp, E)    bf16  time-major embedded inputs (flattened)
       wih_ref : (E, 4*Hp)    bf16  W_ih^T (gate blocks padded to Hp)
       whh_ref : (Hp, 4*Hp)   bf16  W_hh^T
       bias_ref: (1, 4*Hp)    f32   b_ih + b_hh
       hs_ref  : (T, Bp, Hp)  bf16  hidden-state history (output)
       gx_sc   : (T*Bp, 4*Hp) f32   hoisted input-projection scratch
    """
    # Hoisted input projection + bias: ONE big MXU matmul for all T steps.
    gx_sc[...] = (jnp.dot(x_ref[...], wih_ref[...],
                          preferred_element_type=jnp.float32)
                  + bias_ref[...])

    def step(t, carry):
        h_prev, c_prev = carry                                   # f32, in vregs
        row = pl.multiple_of(t * Bp, Bp)
        # gates = gates_x[t] + h_{t-1} @ W_hh^T          (Bp, 4Hp) f32
        gates = gx_sc[pl.ds(row, Bp), :] + jnp.dot(
            h_prev.astype(jnp.bfloat16), whh_ref[...],
            preferred_element_type=jnp.float32)

        # Hp is a multiple of 128 -> all gate slices are lane-aligned.
        i_g = jax.nn.sigmoid(gates[:, 0 * Hp:1 * Hp])
        f_g = jax.nn.sigmoid(gates[:, 1 * Hp:2 * Hp])
        g_g = jnp.tanh(gates[:, 2 * Hp:3 * Hp])
        o_g = jax.nn.sigmoid(gates[:, 3 * Hp:4 * Hp])

        c_new = f_g * c_prev + i_g * g_g
        h_new = o_g * jnp.tanh(c_new)

        hs_ref[t] = h_new.astype(hs_ref.dtype)                   # bf16 history
        return (h_new, c_new)

    # nn.LSTM with no initial state: h0 = c0 = 0.
    h0 = jnp.zeros((Bp, Hp), jnp.float32)
    c0 = jnp.zeros((Bp, Hp), jnp.float32)
    jax.lax.fori_loop(0, T, step, (h0, c0), unroll=unroll)


# --------------------------------------------------------------------------
# Kernel 2: vocab projection, gridded (tiled over the vocab dimension)
# --------------------------------------------------------------------------
def vocab_projection_kernel(hs_ref, wout_ref, bout_ref, out_ref):
    """hs_ref  : (M, Hp)  bf16   all hidden states (M = T*Bp)
       wout_ref: (Hp, tn) bf16   one vocab tile of W_out^T
       bout_ref: (1, tn)  f32    one vocab tile of b_out
       out_ref : (M, tn)  f32    one vocab tile of the logits
    """
    out_ref[...] = (jnp.dot(hs_ref[...], wout_ref[...],
                            preferred_element_type=jnp.float32)
                    + bout_ref[...]).astype(out_ref.dtype)


# --------------------------------------------------------------------------
# Wrapper
# --------------------------------------------------------------------------
def decoder_rnn_forward(features, captions, params):
    """features: (B, E) f32; captions: (B, L) int32 -> logits (B, L, V)."""
    B, E = features.shape
    H = params["whh_t"].shape[0]
    V = params["wout_t"].shape[1]

    Bp = _round_up(max(B, 8), 8)     # full sublane occupancy
    Hp = _round_up(H, 128)           # lane-aligned gate slices
    Vp = _round_up(V, 128)           # lane-dense logit stores

    # ---- glue in plain JAX: embedding gather + feature concat ----
    embedded = jnp.take(params["embed"], captions[:, :-1], axis=0)  # (B, L-1, E)
    x = jnp.concatenate([features[:, None, :], embedded], axis=1)   # (B, T, E)
    T = x.shape[1]
    M = T * Bp

    # time-major, batch padded, flattened, bf16 for the MXU
    x_tbe = jnp.transpose(x, (1, 0, 2))                             # (T, B, E)
    x_tbe = jnp.pad(x_tbe, ((0, 0), (0, Bp - B), (0, 0)))
    x_flat = x_tbe.reshape(M, E).astype(jnp.bfloat16)

    # ---- pad / fuse / cast parameters once, outside the kernel ----
    wih = _pad_gate_cols(params["wih_t"], H, Hp).astype(jnp.bfloat16)    # (E, 4Hp)
    whh = jnp.pad(params["whh_t"], ((0, Hp - H), (0, 0)))
    whh = _pad_gate_cols(whh, H, Hp).astype(jnp.bfloat16)                # (Hp, 4Hp)
    bias = _pad_gate_cols(params["bih"] + params["bhh"],
                          H, Hp).astype(jnp.float32)                     # (1, 4Hp)
    wout = jnp.pad(params["wout_t"],
                   ((0, Hp - H), (0, Vp - V))).astype(jnp.bfloat16)      # (Hp, Vp)
    bout = jnp.pad(params["bout"], ((0, 0), (0, Vp - V))).astype(jnp.float32)

    vmem = pl.BlockSpec(memory_space=pltpu.MemorySpace.VMEM)

    # ---- recurrence kernel ----
    unroll = T if T <= 16 else 8
    lstm_resident = (_nbytes((M, E), jnp.bfloat16)
                     + _nbytes((E, 4 * Hp), jnp.bfloat16)
                     + _nbytes((Hp, 4 * Hp), jnp.bfloat16)
                     + _nbytes((8, 4 * Hp), jnp.float32)
                     + _nbytes((T, 16, Hp), jnp.bfloat16)       # hs (sublane pad)
                     + _nbytes((M, 4 * Hp), jnp.float32))       # gx scratch
    hs = pl.pallas_call(
        functools.partial(lstm_recurrence_kernel, T=T, Bp=Bp, Hp=Hp,
                          unroll=unroll),
        out_shape=jax.ShapeDtypeStruct((T, Bp, Hp), jnp.bfloat16),
        in_specs=[vmem] * 4,
        out_specs=vmem,
        scratch_shapes=[pltpu.VMEM((M, 4 * Hp), jnp.float32)],
        compiler_params=pltpu.CompilerParams(
            vmem_limit_bytes=_vmem_limit(lstm_resident)),
    )(x_flat, wih, whh, bias)

    hs_flat = hs.reshape(M, Hp)                                  # (T*Bp, Hp) bf16

    # ---- gridded vocab projection ----
    tn = 512 if Vp % 512 == 0 else (256 if Vp % 256 == 0 else 128)
    proj_resident = 2 * (_nbytes((M, Hp), jnp.bfloat16)
                         + _nbytes((Hp, tn), jnp.bfloat16)
                         + _nbytes((8, tn), jnp.float32)
                         + _nbytes((M, tn), jnp.float32))
    logits = pl.pallas_call(
        vocab_projection_kernel,
        out_shape=jax.ShapeDtypeStruct((M, Vp), jnp.float32),
        grid=(Vp // tn,),
        in_specs=[pl.BlockSpec((M, Hp), lambda j: (0, 0)),
                  pl.BlockSpec((Hp, tn), lambda j: (0, j)),
                  pl.BlockSpec((1, tn), lambda j: (0, j))],
        out_specs=pl.BlockSpec((M, tn), lambda j: (0, j)),
        compiler_params=pltpu.CompilerParams(
            dimension_semantics=("parallel",),
            vmem_limit_bytes=_vmem_limit(proj_resident)),
    )(hs_flat, wout, bout)

    # back to PyTorch batch-first convention, drop batch/vocab padding
    out = logits.reshape(T, Bp, Vp)
    return jnp.transpose(out, (1, 0, 2))[:B, :, :V]


# --------------------------------------------------------------------------
# Pure-JAX f32 reference (correctness check)
# --------------------------------------------------------------------------
def _reference_forward(features, captions, params):
    embedded = jnp.take(params["embed"], captions[:, :-1], axis=0)
    x = jnp.concatenate([features[:, None, :], embedded], axis=1)   # (B, T, E)
    B, T, _ = x.shape
    H = params["whh_t"].shape[0]

    def step(carry, x_t):
        h, c = carry
        gates = (x_t @ params["wih_t"] + h @ params["whh_t"]
                 + params["bih"][0] + params["bhh"][0])
        i = jax.nn.sigmoid(gates[:, 0:H])
        f = jax.nn.sigmoid(gates[:, H:2 * H])
        g = jnp.tanh(gates[:, 2 * H:3 * H])
        o = jax.nn.sigmoid(gates[:, 3 * H:4 * H])
        c = f * c + i * g
        h = o * jnp.tanh(c)
        return (h, c), h

    h0 = jnp.zeros((B, H), jnp.float32)
    c0 = jnp.zeros((B, H), jnp.float32)
    _, hs = jax.lax.scan(step, (h0, c0), jnp.transpose(x, (1, 0, 2)))
    hs = jnp.transpose(hs, (1, 0, 2))                               # (B, T, H)
    return hs @ params["wout_t"] + params["bout"][0]


if __name__ == "__main__":
    # Small shapes consistent with the module:
    B, E, H, V, L = 2, 32, 32, 64, 8   # batch, embed, hidden, vocab, caption len

    key = jax.random.PRNGKey(0)
    ks = jax.random.split(key, 9)
    scale = 0.1
    params = {
        "embed":  (jax.random.normal(ks[0], (V, E), jnp.float32) * scale),
        "wih_t":  (jax.random.normal(ks[1], (E, 4 * H), jnp.float32) * scale),
        "whh_t":  (jax.random.normal(ks[2], (H, 4 * H), jnp.float32) * scale),
        "bih":    (jax.random.normal(ks[3], (1, 4 * H), jnp.float32) * scale),
        "bhh":    (jax.random.normal(ks[4], (1, 4 * H), jnp.float32) * scale),
        "wout_t": (jax.random.normal(ks[5], (H, V), jnp.float32) * scale),
        "bout":   (jax.random.normal(ks[6], (1, V), jnp.float32) * scale),
    }
    features = jax.random.normal(ks[7], (B, E), jnp.float32)
    captions = jax.random.randint(ks[8], (B, L), 0, V, dtype=jnp.int32)

    out = decoder_rnn_forward(features, captions, params)
    out = jax.block_until_ready(out)
    assert out.shape == (B, L, V), out.shape

    ref = jax.block_until_ready(_reference_forward(features, captions, params))
    assert jnp.allclose(out, ref, rtol=2e-2, atol=2e-2), \
        float(jnp.max(jnp.abs(out - ref)))

    print("KERNEL_OK")
</pallas_src>

<mosaic_0001>
module attributes {stable_mosaic.version = 11 : i64} {
  func.func @lstm_recurrence_kernel(%arg0: memref<64x32xbf16, #tpu.memory_space<vmem>>, %arg1: memref<32x512xbf16, #tpu.memory_space<vmem>>, %arg2: memref<128x512xbf16, #tpu.memory_space<vmem>>, %arg3: memref<1x512xf32, #tpu.memory_space<vmem>>, %arg4: memref<8x8x128xbf16, #tpu.memory_space<vmem>>, %arg5: memref<64x512xf32, #tpu.memory_space<vmem>>) attributes {dimension_semantics = [], scalar_prefetch = 0 : i64, scratch_operands = 1 : i64, tpu.core_type = #tpu.core_type<tc>} {
    %c0 = arith.constant 0 : index
    %c0_0 = arith.constant 0 : index
    %0 = vector.load %arg0[%c0, %c0_0] : memref<64x32xbf16, #tpu.memory_space<vmem>>, vector<64x32xbf16>
    %c0_1 = arith.constant 0 : index
    %c0_2 = arith.constant 0 : index
    %1 = vector.load %arg1[%c0_1, %c0_2] : memref<32x512xbf16, #tpu.memory_space<vmem>>, vector<32x512xbf16>
    %cst = arith.constant dense<0.000000e+00> : vector<64x512xf32>
    %2 = tpu.matmul %0, %1, %cst {dimension_numbers = #tpu.dot_dimension_numbers<[1], [0], [0], [1], [0, 0, 1, 1], [], []>} : vector<64x32xbf16>, vector<32x512xbf16>, vector<64x512xf32> -> vector<64x512xf32>
    %c0_3 = arith.constant 0 : index
    %c0_4 = arith.constant 0 : index
    %3 = vector.load %arg3[%c0_3, %c0_4] : memref<1x512xf32, #tpu.memory_space<vmem>>, vector<1x512xf32>
    %4 = vector.broadcast %3 : vector<1x512xf32> to vector<64x512xf32>
    %5 = arith.addf %2, %4 : vector<64x512xf32>
    %c0_5 = arith.constant 0 : index
    %c0_6 = arith.constant 0 : index
    %6 = vector.load %arg5[%c0_5, %c0_6] : memref<64x512xf32, #tpu.memory_space<vmem>>, vector<64x512xf32>
    tpu.vector_store %arg5[%c0_5, %c0_6], %5 {strides = array<i32>} : memref<64x512xf32, #tpu.memory_space<vmem>>, vector<64x512xf32>,
    %cst_7 = arith.constant 0.000000e+00 : f32
    %7 = vector.broadcast %cst_7 : f32 to vector<8x128xf32>
    %cst_8 = arith.constant 0.000000e+00 : f32
    %8 = vector.broadcast %cst_8 : f32 to vector<8x128xf32>
    %c0_i32 = arith.constant 0 : i32
    %c8_i32 = arith.constant 8 : i32
    %9 = arith.muli %c0_i32, %c8_i32 : i32
    %10 = tpu.assume_multiple %9, 8 : i32
    %11 = arith.index_cast %10 : i32 to index
    %c0_9 = arith.constant 0 : index
    %12 = vector.load %arg5[%11, %c0_9] : memref<64x512xf32, #tpu.memory_space<vmem>>, vector<8x512xf32>
    %13 = arith.truncf %7 : vector<8x128xf32> to vector<8x128xbf16>
    %c0_10 = arith.constant 0 : index
    %c0_11 = arith.constant 0 : index
    %14 = vector.load %arg2[%c0_10, %c0_11] : memref<128x512xbf16, #tpu.memory_space<vmem>>, vector<128x512xbf16>
    %cst_12 = arith.constant dense<0.000000e+00> : vector<8x512xf32>
    %15 = tpu.matmul %13, %14, %cst_12 {dimension_numbers = #tpu.dot_dimension_numbers<[1], [0], [0], [1], [0, 0, 1, 1], [], []>} : vector<8x128xbf16>, vector<128x512xbf16>, vector<8x512xf32> -> vector<8x512xf32>
    %16 = arith.addf %12, %15 : vector<8x512xf32>
    %17 = vector.extract_strided_slice %16 {offsets = [0, 0], sizes = [8, 128], strides = [1, 1]} : vector<8x512xf32> to vector<8x128xf32>
    %18 = arith.negf %17 : vector<8x128xf32>
    %19 = math.exp %18 : vector<8x128xf32>
    %cst_13 = arith.constant 1.000000e+00 : f32
    %20 = vector.broadcast %cst_13 : f32 to vector<8x128xf32>
    %21 = arith.addf %20, %19 : vector<8x128xf32>
    %22 = arith.divf %20, %21 : vector<8x128xf32>
    %23 = vector.extract_strided_slice %16 {offsets = [0, 128], sizes = [8, 128], strides = [1, 1]} : vector<8x512xf32> to vector<8x128xf32>
    %24 = arith.negf %23 : vector<8x128xf32>
    %25 = math.exp %24 : vector<8x128xf32>
    %cst_14 = arith.constant 1.000000e+00 : f32
    %26 = vector.broadcast %cst_14 : f32 to vector<8x128xf32>
    %27 = arith.addf %26, %25 : vector<8x128xf32>
    %28 = arith.divf %26, %27 : vector<8x128xf32>
    %29 = vector.extract_strided_slice %16 {offsets = [0, 256], sizes = [8, 128], strides = [1, 1]} : vector<8x512xf32> to vector<8x128xf32>
    %30 = math.tanh %29 : vector<8x128xf32>
    %31 = vector.extract_strided_slice %16 {offsets = [0, 384], sizes = [8, 128], strides = [1, 1]} : vector<8x512xf32> to vector<8x128xf32>
    %32 = arith.negf %31 : vector<8x128xf32>
    %33 = math.exp %32 : vector<8x128xf32>
    %cst_15 = arith.constant 1.000000e+00 : f32
    %34 = vector.broadcast %cst_15 : f32 to vector<8x128xf32>
    %35 = arith.addf %34, %33 : vector<8x128xf32>
    %36 = arith.divf %34, %35 : vector<8x128xf32>
    %37 = arith.mulf %28, %8 : vector<8x128xf32>
    %38 = arith.mulf %22, %30 : vector<8x128xf32>
    %39 = arith.addf %37, %38 : vector<8x128xf32>
    %40 = math.tanh %39 : vector<8x128xf32>
    %41 = arith.mulf %36, %40 : vector<8x128xf32>
    %42 = arith.truncf %41 : vector<8x128xf32> to vector<8x128xbf16>
    %43 = arith.index_cast %c0_i32 : i32 to index
    %c0_16 = arith.constant 0 : index
    %c0_17 = arith.constant 0 : index
    %44 = vector.load %arg4[%43, %c0_16, %c0_17] : memref<8x8x128xbf16, #tpu.memory_space<vmem>>, vector<1x8x128xbf16>
    %45 = vector.shape_cast %44 : vector<1x8x128xbf16> to vector<8x128xbf16>
    %46 = vector.shape_cast %42 : vector<8x128xbf16> to vector<1x8x128xbf16>
    tpu.vector_store %arg4[%43, %c0_16, %c0_17], %46 {strides = array<i32>} : memref<8x8x128xbf16, #tpu.memory_space<vmem>>, vector<1x8x128xbf16>,
    %c1_i32 = arith.constant 1 : i32
    %c8_i32_18 = arith.constant 8 : i32
    %47 = arith.muli %c1_i32, %c8_i32_18 : i32
    %48 = tpu.assume_multiple %47, 8 : i32
    %49 = arith.index_cast %48 : i32 to index
    %c0_19 = arith.constant 0 : index
    %50 = vector.load %arg5[%49, %c0_19] : memref<64x512xf32, #tpu.memory_space<vmem>>, vector<8x512xf32>
    %51 = arith.truncf %41 : vector<8x128xf32> to vector<8x128xbf16>
    %c0_20 = arith.constant 0 : index
    %c0_21 = arith.constant 0 : index
    %52 = vector.load %arg2[%c0_20, %c0_21] : memref<128x512xbf16, #tpu.memory_space<vmem>>, vector<128x512xbf16>
    %cst_22 = arith.constant dense<0.000000e+00> : vector<8x512xf32>
    %53 = tpu.matmul %51, %52, %cst_22 {dimension_numbers = #tpu.dot_dimension_numbers<[1], [0], [0], [1], [0, 0, 1, 1], [], []>} : vector<8x128xbf16>, vector<128x512xbf16>, vector<8x512xf32> -> vector<8x512xf32>
    %54 = arith.addf %50, %53 : vector<8x512xf32>
    %55 = vector.extract_strided_slice %54 {offsets = [0, 0], sizes = [8, 128], strides = [1, 1]} : vector<8x512xf32> to vector<8x128xf32>
    %56 = arith.negf %55 : vector<8x128xf32>
    %57 = math.exp %56 : vector<8x128xf32>
    %cst_23 = arith.constant 1.000000e+00 : f32
    %58 = vector.broadcast %cst_23 : f32 to vector<8x128xf32>
    %59 = arith.addf %58, %57 : vector<8x128xf32>
    %60 = arith.divf %58, %59 : vector<8x128xf32>
    %61 = vector.extract_strided_slice %54 {offsets = [0, 128], sizes = [8, 128], strides = [1, 1]} : vector<8x512xf32> to vector<8x128xf32>
    %62 = arith.negf %61 : vector<8x128xf32>
    %63 = math.exp %62 : vector<8x128xf32>
    %cst_24 = arith.constant 1.000000e+00 : f32
    %64 = vector.broadcast %cst_24 : f32 to vector<8x128xf32>
    %65 = arith.addf %64, %63 : vector<8x128xf32>
    %66 = arith.divf %64, %65 : vector<8x128xf32>
    %67 = vector.extract_strided_slice %54 {offsets = [0, 256], sizes = [8, 128], strides = [1, 1]} : vector<8x512xf32> to vector<8x128xf32>
    %68 = math.tanh %67 : vector<8x128xf32>
    %69 = vector.extract_strided_slice %54 {offsets = [0, 384], sizes = [8, 128], strides = [1, 1]} : vector<8x512xf32> to vector<8x128xf32>
    %70 = arith.negf %69 : vector<8x128xf32>
    %71 = math.exp %70 : vector<8x128xf32>
    %cst_25 = arith.constant 1.000000e+00 : f32
    %72 = vector.broadcast %cst_25 : f32 to vector<8x128xf32>
    %73 = arith.addf %72, %71 : vector<8x128xf32>
    %74 = arith.divf %72, %73 : vector<8x128xf32>
    %75 = arith.mulf %66, %39 : vector<8x128xf32>
    %76 = arith.mulf %60, %68 : vector<8x128xf32>
    %77 = arith.addf %75, %76 : vector<8x128xf32>
    %78 = math.tanh %77 : vector<8x128xf32>
    %79 = arith.mulf %74, %78 : vector<8x128xf32>
    %80 = arith.truncf %79 : vector<8x128xf32> to vector<8x128xbf16>
    %81 = arith.index_cast %c1_i32 : i32 to index
    %c0_26 = arith.constant 0 : index
    %c0_27 = arith.constant 0 : index
    %82 = vector.load %arg4[%81, %c0_26, %c0_27] : memref<8x8x128xbf16, #tpu.memory_space<vmem>>, vector<1x8x128xbf16>
    %83 = vector.shape_cast %82 : vector<1x8x128xbf16> to vector<8x128xbf16>
    %84 = vector.shape_cast %80 : vector<8x128xbf16> to vector<1x8x128xbf16>
    tpu.vector_store %arg4[%81, %c0_26, %c0_27], %84 {strides = array<i32>} : memref<8x8x128xbf16, #tpu.memory_space<vmem>>, vector<1x8x128xbf16>,
    %c2_i32 = arith.constant 2 : i32
    %c8_i32_28 = arith.constant 8 : i32
    %85 = arith.muli %c2_i32, %c8_i32_28 : i32
    %86 = tpu.assume_multiple %85, 8 : i32
    %87 = arith.index_cast %86 : i32 to index
    %c0_29 = arith.constant 0 : index
    %88 = vector.load %arg5[%87, %c0_29] : memref<64x512xf32, #tpu.memory_space<vmem>>, vector<8x512xf32>
    %89 = arith.truncf %79 : vector<8x128xf32> to vector<8x128xbf16>
    %c0_30 = arith.constant 0 : index
    %c0_31 = arith.constant 0 : index
    %90 = vector.load %arg2[%c0_30, %c0_31] : memref<128x512xbf16, #tpu.memory_space<vmem>>, vector<128x512xbf16>
    %cst_32 = arith.constant dense<0.000000e+00> : vector<8x512xf32>
    %91 = tpu.matmul %89, %90, %cst_32 {dimension_numbers = #tpu.dot_dimension_numbers<[1], [0], [0], [1], [0, 0, 1, 1], [], []>} : vector<8x128xbf16>, vector<128x512xbf16>, vector<8x512xf32> -> vector<8x512xf32>
    %92 = arith.addf %88, %91 : vector<8x512xf32>
    %93 = vector.extract_strided_slice %92 {offsets = [0, 0], sizes = [8, 128], strides = [1, 1]} : vector<8x512xf32> to vector<8x128xf32>
    %94 = arith.negf %93 : vector<8x128xf32>
    %95 = math.exp %94 : vector<8x128xf32>
    %cst_33 = arith.constant 1.000000e+00 : f32
    %96 = vector.broadcast %cst_33 : f32 to vector<8x128xf32>
    %97 = arith.addf %96, %95 : vector<8x128xf32>
    %98 = arith.divf %96, %97 : vector<8x128xf32>
    %99 = vector.extract_strided_slice %92 {offsets = [0, 128], sizes = [8, 128], strides = [1, 1]} : vector<8x512xf32> to vector<8x128xf32>
    %100 = arith.negf %99 : vector<8x128xf32>
    %101 = math.exp %100 : vector<8x128xf32>
    %cst_34 = arith.constant 1.000000e+00 : f32
    %102 = vector.broadcast %cst_34 : f32 to vector<8x128xf32>
    %103 = arith.addf %102, %101 : vector<8x128xf32>
    %104 = arith.divf %102, %103 : vector<8x128xf32>
    %105 = vector.extract_strided_slice %92 {offsets = [0, 256], sizes = [8, 128], strides = [1, 1]} : vector<8x512xf32> to vector<8x128xf32>
    %106 = math.tanh %105 : vector<8x128xf32>
    %107 = vector.extract_strided_slice %92 {offsets = [0, 384], sizes = [8, 128], strides = [1, 1]} : vector<8x512xf32> to vector<8x128xf32>
    %108 = arith.negf %107 : vector<8x128xf32>
    %109 = math.exp %108 : vector<8x128xf32>
    %cst_35 = arith.constant 1.000000e+00 : f32
    %110 = vector.broadcast %cst_35 : f32 to vector<8x128xf32>
    %111 = arith.addf %110, %109 : vector<8x128xf32>
    %112 = arith.divf %110, %111 : vector<8x128xf32>
    %113 = arith.mulf %104, %77 : vector<8x128xf32>
    %114 = arith.mulf %98, %106 : vector<8x128xf32>
    %115 = arith.addf %113, %114 : vector<8x128xf32>
    %116 = math.tanh %115 : vector<8x128xf32>
    %117 = arith.mulf %112, %116 : vector<8x128xf32>
    %118 = arith.truncf %117 : vector<8x128xf32> to vector<8x128xbf16>
    %119 = arith.index_cast %c2_i32 : i32 to index
    %c0_36 = arith.constant 0 : index
    %c0_37 = arith.constant 0 : index
    %120 = vector.load %arg4[%119, %c0_36, %c0_37] : memref<8x8x128xbf16, #tpu.memory_space<vmem>>, vector<1x8x128xbf16>
    %121 = vector.shape_cast %120 : vector<1x8x128xbf16> to vector<8x128xbf16>
    %122 = vector.shape_cast %118 : vector<8x128xbf16> to vector<1x8x128xbf16>
    tpu.vector_store %arg4[%119, %c0_36, %c0_37], %122 {strides = array<i32>} : memref<8x8x128xbf16, #tpu.memory_space<vmem>>, vector<1x8x128xbf16>,
    %c3_i32 = arith.constant 3 : i32
    %c8_i32_38 = arith.constant 8 : i32
    %123 = arith.muli %c3_i32, %c8_i32_38 : i32
    %124 = tpu.assume_multiple %123, 8 : i32
    %125 = arith.index_cast %124 : i32 to index
    %c0_39 = arith.constant 0 : index
    %126 = vector.load %arg5[%125, %c0_39] : memref<64x512xf32, #tpu.memory_space<vmem>>, vector<8x512xf32>
    %127 = arith.truncf %117 : vector<8x128xf32> to vector<8x128xbf16>
    %c0_40 = arith.constant 0 : index
    %c0_41 = arith.constant 0 : index
    %128 = vector.load %arg2[%c0_40, %c0_41] : memref<128x512xbf16, #tpu.memory_space<vmem>>, vector<128x512xbf16>
    %cst_42 = arith.constant dense<0.000000e+00> : vector<8x512xf32>
    %129 = tpu.matmul %127, %128, %cst_42 {dimension_numbers = #tpu.dot_dimension_numbers<[1], [0], [0], [1], [0, 0, 1, 1], [], []>} : vector<8x128xbf16>, vector<128x512xbf16>, vector<8x512xf32> -> vector<8x512xf32>
    %130 = arith.addf %126, %129 : vector<8x512xf32>
    %131 = vector.extract_strided_slice %130 {offsets = [0, 0], sizes = [8, 128], strides = [1, 1]} : vector<8x512xf32> to vector<8x128xf32>
    %132 = arith.negf %131 : vector<8x128xf32>
    %133 = math.exp %132 : vector<8x128xf32>
    %cst_43 = arith.constant 1.000000e+00 : f32
    %134 = vector.broadcast %cst_43 : f32 to vector<8x128xf32>
    %135 = arith.addf %134, %133 : vector<8x128xf32>
    %136 = arith.divf %134, %135 : vector<8x128xf32>
    %137 = vector.extract_strided_slice %130 {offsets = [0, 128], sizes = [8, 128], strides = [1, 1]} : vector<8x512xf32> to vector<8x128xf32>
    %138 = arith.negf %137 : vector<8x128xf32>
    %139 = math.exp %138 : vector<8x128xf32>
    %cst_44 = arith.constant 1.000000e+00 : f32
    %140 = vector.broadcast %cst_44 : f32 to vector<8x128xf32>
    %141 = arith.addf %140, %139 : vector<8x128xf32>
    %142 = arith.divf %140, %141 : vector<8x128xf32>
    %143 = vector.extract_strided_slice %130 {offsets = [0, 256], sizes = [8, 128], strides = [1, 1]} : vector<8x512xf32> to vector<8x128xf32>
    %144 = math.tanh %143 : vector<8x128xf32>
    %145 = vector.extract_strided_slice %130 {offsets = [0, 384], sizes = [8, 128], strides = [1, 1]} : vector<8x512xf32> to vector<8x128xf32>
    %146 = arith.negf %145 : vector<8x128xf32>
    %147 = math.exp %146 : vector<8x128xf32>
    %cst_45 = arith.constant 1.000000e+00 : f32
    %148 = vector.broadcast %cst_45 : f32 to vector<8x128xf32>
    %149 = arith.addf %148, %147 : vector<8x128xf32>
    %150 = arith.divf %148, %149 : vector<8x128xf32>
    %151 = arith.mulf %142, %115 : vector<8x128xf32>
    %152 = arith.mulf %136, %144 : vector<8x128xf32>
    %153 = arith.addf %151, %152 : vector<8x128xf32>
    %154 = math.tanh %153 : vector<8x128xf32>
    %155 = arith.mulf %150, %154 : vector<8x128xf32>
    %156 = arith.truncf %155 : vector<8x128xf32> to vector<8x128xbf16>
    %157 = arith.index_cast %c3_i32 : i32 to index
    %c0_46 = arith.constant 0 : index
    %c0_47 = arith.constant 0 : index
    %158 = vector.load %arg4[%157, %c0_46, %c0_47] : memref<8x8x128xbf16, #tpu.memory_space<vmem>>, vector<1x8x128xbf16>
    %159 = vector.shape_cast %158 : vector<1x8x128xbf16> to vector<8x128xbf16>
    %160 = vector.shape_cast %156 : vector<8x128xbf16> to vector<1x8x128xbf16>
    tpu.vector_store %arg4[%157, %c0_46, %c0_47], %160 {strides = array<i32>} : memref<8x8x128xbf16, #tpu.memory_space<vmem>>, vector<1x8x128xbf16>,
    %c4_i32 = arith.constant 4 : i32
    %c8_i32_48 = arith.constant 8 : i32
    %161 = arith.muli %c4_i32, %c8_i32_48 : i32
    %162 = tpu.assume_multiple %161, 8 : i32
    %163 = arith.index_cast %162 : i32 to index
    %c0_49 = arith.constant 0 : index
    %164 = vector.load %arg5[%163, %c0_49] : memref<64x512xf32, #tpu.memory_space<vmem>>, vector<8x512xf32>
    %165 = arith.truncf %155 : vector<8x128xf32> to vector<8x128xbf16>
    %c0_50 = arith.constant 0 : index
    %c0_51 = arith.constant 0 : index
    %166 = vector.load %arg2[%c0_50, %c0_51] : memref<128x512xbf16, #tpu.memory_space<vmem>>, vector<128x512xbf16>
    %cst_52 = arith.constant dense<0.000000e+00> : vector<8x512xf32>
    %167 = tpu.matmul %165, %166, %cst_52 {dimension_numbers = #tpu.dot_dimension_numbers<[1], [0], [0], [1], [0, 0, 1, 1], [], []>} : vector<8x128xbf16>, vector<128x512xbf16>, vector<8x512xf32> -> vector<8x512xf32>
    %168 = arith.addf %164, %167 : vector<8x512xf32>
    %169 = vector.extract_strided_slice %168 {offsets = [0, 0], sizes = [8, 128], strides = [1, 1]} : vector<8x512xf32> to vector<8x128xf32>
    %170 = arith.negf %169 : vector<8x128xf32>
    %171 = math.exp %170 : vector<8x128xf32>
    %cst_53 = arith.constant 1.000000e+00 : f32
    %172 = vector.broadcast %cst_53 : f32 to vector<8x128xf32>
    %173 = arith.addf %172, %171 : vector<8x128xf32>
    %174 = arith.divf %172, %173 : vector<8x128xf32>
    %175 = vector.extract_strided_slice %168 {offsets = [0, 128], sizes = [8, 128], strides = [1, 1]} : vector<8x512xf32> to vector<8x128xf32>
    %176 = arith.negf %175 : vector<8x128xf32>
    %177 = math.exp %176 : vector<8x128xf32>
    %cst_54 = arith.constant 1.000000e+00 : f32
    %178 = vector.broadcast %cst_54 : f32 to vector<8x128xf32>
    %179 = arith.addf %178, %177 : vector<8x128xf32>
    %180 = arith.divf %178, %179 : vector<8x128xf32>
    %181 = vector.extract_strided_slice %168 {offsets = [0, 256], sizes = [8, 128], strides = [1, 1]} : vector<8x512xf32> to vector<8x128xf32>
    %182 = math.tanh %181 : vector<8x128xf32>
    %183 = vector.extract_strided_slice %168 {offsets = [0, 384], sizes = [8, 128], strides = [1, 1]} : vector<8x512xf32> to vector<8x128xf32>
    %184 = arith.negf %183 : vector<8x128xf32>
    %185 = math.exp %184 : vector<8x128xf32>
    %cst_55 = arith.constant 1.000000e+00 : f32
    %186 = vector.broadcast %cst_55 : f32 to vector<8x128xf32>
    %187 = arith.addf %186, %185 : vector<8x128xf32>
    %188 = arith.divf %186, %187 : vector<8x128xf32>
    %189 = arith.mulf %180, %153 : vector<8x128xf32>
    %190 = arith.mulf %174, %182 : vector<8x128xf32>
    %191 = arith.addf %189, %190 : vector<8x128xf32>
    %192 = math.tanh %191 : vector<8x128xf32>
    %193 = arith.mulf %188, %192 : vector<8x128xf32>
    %194 = arith.truncf %193 : vector<8x128xf32> to vector<8x128xbf16>
    %195 = arith.index_cast %c4_i32 : i32 to index
    %c0_56 = arith.constant 0 : index
    %c0_57 = arith.constant 0 : index
    %196 = vector.load %arg4[%195, %c0_56, %c0_57] : memref<8x8x128xbf16, #tpu.memory_space<vmem>>, vector<1x8x128xbf16>
    %197 = vector.shape_cast %196 : vector<1x8x128xbf16> to vector<8x128xbf16>
    %198 = vector.shape_cast %194 : vector<8x128xbf16> to vector<1x8x128xbf16>
    tpu.vector_store %arg4[%195, %c0_56, %c0_57], %198 {strides = array<i32>} : memref<8x8x128xbf16, #tpu.memory_space<vmem>>, vector<1x8x128xbf16>,
    %c5_i32 = arith.constant 5 : i32
    %c8_i32_58 = arith.constant 8 : i32
    %199 = arith.muli %c5_i32, %c8_i32_58 : i32
    %200 = tpu.assume_multiple %199, 8 : i32
    %201 = arith.index_cast %200 : i32 to index
    %c0_59 = arith.constant 0 : index
    %202 = vector.load %arg5[%201, %c0_59] : memref<64x512xf32, #tpu.memory_space<vmem>>, vector<8x512xf32>
    %203 = arith.truncf %193 : vector<8x128xf32> to vector<8x128xbf16>
    %c0_60 = arith.constant 0 : index
    %c0_61 = arith.constant 0 : index
    %204 = vector.load %arg2[%c0_60, %c0_61] : memref<128x512xbf16, #tpu.memory_space<vmem>>, vector<128x512xbf16>
    %cst_62 = arith.constant dense<0.000000e+00> : vector<8x512xf32>
    %205 = tpu.matmul %203, %204, %cst_62 {dimension_numbers = #tpu.dot_dimension_numbers<[1], [0], [0], [1], [0, 0, 1, 1], [], []>} : vector<8x128xbf16>, vector<128x512xbf16>, vector<8x512xf32> -> vector<8x512xf32>
    %206 = arith.addf %202, %205 : vector<8x512xf32>
    %207 = vector.extract_strided_slice %206 {offsets = [0, 0], sizes = [8, 128], strides = [1, 1]} : vector<8x512xf32> to vector<8x128xf32>
    %208 = arith.negf %207 : vector<8x128xf32>
    %209 = math.exp %208 : vector<8x128xf32>
    %cst_63 = arith.constant 1.000000e+00 : f32
    %210 = vector.broadcast %cst_63 : f32 to vector<8x128xf32>
    %211 = arith.addf %210, %209 : vector<8x128xf32>
    %212 = arith.divf %210, %211 : vector<8x128xf32>
    %213 = vector.extract_strided_slice %206 {offsets = [0, 128], sizes = [8, 128], strides = [1, 1]} : vector<8x512xf32> to vector<8x128xf32>
    %214 = arith.negf %213 : vector<8x128xf32>
    %215 = math.exp %214 : vector<8x128xf32>
    %cst_64 = arith.constant 1.000000e+00 : f32
    %216 = vector.broadcast %cst_64 : f32 to vector<8x128xf32>
    %217 = arith.addf %216, %215 : vector<8x128xf32>
    %218 = arith.divf %216, %217 : vector<8x128xf32>
    %219 = vector.extract_strided_slice %206 {offsets = [0, 256], sizes = [8, 128], strides = [1, 1]} : vector<8x512xf32> to vector<8x128xf32>
    %220 = math.tanh %219 : vector<8x128xf32>
    %221 = vector.extract_strided_slice %206 {offsets = [0, 384], sizes = [8, 128], strides = [1, 1]} : vector<8x512xf32> to vector<8x128xf32>
    %222 = arith.negf %221 : vector<8x128xf32>
    %223 = math.exp %222 : vector<8x128xf32>
    %cst_65 = arith.constant 1.000000e+00 : f32
    %224 = vector.broadcast %cst_65 : f32 to vector<8x128xf32>
    %225 = arith.addf %224, %223 : vector<8x128xf32>
    %226 = arith.divf %224, %225 : vector<8x128xf32>
    %227 = arith.mulf %218, %191 : vector<8x128xf32>
    %228 = arith.mulf %212, %220 : vector<8x128xf32>
    %229 = arith.addf %227, %228 : vector<8x128xf32>
    %230 = math.tanh %229 : vector<8x128xf32>
    %231 = arith.mulf %226, %230 : vector<8x128xf32>
    %232 = arith.truncf %231 : vector<8x128xf32> to vector<8x128xbf16>
    %233 = arith.index_cast %c5_i32 : i32 to index
    %c0_66 = arith.constant 0 : index
    %c0_67 = arith.constant 0 : index
    %234 = vector.load %arg4[%233, %c0_66, %c0_67] : memref<8x8x128xbf16, #tpu.memory_space<vmem>>, vector<1x8x128xbf16>
    %235 = vector.shape_cast %234 : vector<1x8x128xbf16> to vector<8x128xbf16>
    %236 = vector.shape_cast %232 : vector<8x128xbf16> to vector<1x8x128xbf16>
    tpu.vector_store %arg4[%233, %c0_66, %c0_67], %236 {strides = array<i32>} : memref<8x8x128xbf16, #tpu.memory_space<vmem>>, vector<1x8x128xbf16>,
    %c6_i32 = arith.constant 6 : i32
    %c8_i32_68 = arith.constant 8 : i32
    %237 = arith.muli %c6_i32, %c8_i32_68 : i32
    %238 = tpu.assume_multiple %237, 8 : i32
    %239 = arith.index_cast %238 : i32 to index
    %c0_69 = arith.constant 0 : index
    %240 = vector.load %arg5[%239, %c0_69] : memref<64x512xf32, #tpu.memory_space<vmem>>, vector<8x512xf32>
    %241 = arith.truncf %231 : vector<8x128xf32> to vector<8x128xbf16>
    %c0_70 = arith.constant 0 : index
    %c0_71 = arith.constant 0 : index
    %242 = vector.load %arg2[%c0_70, %c0_71] : memref<128x512xbf16, #tpu.memory_space<vmem>>, vector<128x512xbf16>
    %cst_72 = arith.constant dense<0.000000e+00> : vector<8x512xf32>
    %243 = tpu.matmul %241, %242, %cst_72 {dimension_numbers = #tpu.dot_dimension_numbers<[1], [0], [0], [1], [0, 0, 1, 1], [], []>} : vector<8x128xbf16>, vector<128x512xbf16>, vector<8x512xf32> -> vector<8x512xf32>
    %244 = arith.addf %240, %243 : vector<8x512xf32>
    %245 = vector.extract_strided_slice %244 {offsets = [0, 0], sizes = [8, 128], strides = [1, 1]} : vector<8x512xf32> to vector<8x128xf32>
    %246 = arith.negf %245 : vector<8x128xf32>
    %247 = math.exp %246 : vector<8x128xf32>
    %cst_73 = arith.constant 1.000000e+00 : f32
    %248 = vector.broadcast %cst_73 : f32 to vector<8x128xf32>
    %249 = arith.addf %248, %247 : vector<8x128xf32>
    %250 = arith.divf %248, %249 : vector<8x128xf32>
    %251 = vector.extract_strided_slice %244 {offsets = [0, 128], sizes = [8, 128], strides = [1, 1]} : vector<8x512xf32> to vector<8x128xf32>
    %252 = arith.negf %251 : vector<8x128xf32>
    %253 = math.exp %252 : vector<8x128xf32>
    %cst_74 = arith.constant 1.000000e+00 : f32
    %254 = vector.broadcast %cst_74 : f32 to vector<8x128xf32>
    %255 = arith.addf %254, %253 : vector<8x128xf32>
    %256 = arith.divf %254, %255 : vector<8x128xf32>
    %257 = vector.extract_strided_slice %244 {offsets = [0, 256], sizes = [8, 128], strides = [1, 1]} : vector<8x512xf32> to vector<8x128xf32>
    %258 = math.tanh %257 : vector<8x128xf32>
    %259 = vector.extract_strided_slice %244 {offsets = [0, 384], sizes = [8, 128], strides = [1, 1]} : vector<8x512xf32> to vector<8x128xf32>
    %260 = arith.negf %259 : vector<8x128xf32>
    %261 = math.exp %260 : vector<8x128xf32>
    %cst_75 = arith.constant 1.000000e+00 : f32
    %262 = vector.broadcast %cst_75 : f32 to vector<8x128xf32>
    %263 = arith.addf %262, %261 : vector<8x128xf32>
    %264 = arith.divf %262, %263 : vector<8x128xf32>
    %265 = arith.mulf %256, %229 : vector<8x128xf32>
    %266 = arith.mulf %250, %258 : vector<8x128xf32>
    %267 = arith.addf %265, %266 : vector<8x128xf32>
    %268 = math.tanh %267 : vector<8x128xf32>
    %269 = arith.mulf %264, %268 : vector<8x128xf32>
    %270 = arith.truncf %269 : vector<8x128xf32> to vector<8x128xbf16>
    %271 = arith.index_cast %c6_i32 : i32 to index
    %c0_76 = arith.constant 0 : index
    %c0_77 = arith.constant 0 : index
    %272 = vector.load %arg4[%271, %c0_76, %c0_77] : memref<8x8x128xbf16, #tpu.memory_space<vmem>>, vector<1x8x128xbf16>
    %273 = vector.shape_cast %272 : vector<1x8x128xbf16> to vector<8x128xbf16>
    %274 = vector.shape_cast %270 : vector<8x128xbf16> to vector<1x8x128xbf16>
    tpu.vector_store %arg4[%271, %c0_76, %c0_77], %274 {strides = array<i32>} : memref<8x8x128xbf16, #tpu.memory_space<vmem>>, vector<1x8x128xbf16>,
    %c7_i32 = arith.constant 7 : i32
    %c8_i32_78 = arith.constant 8 : i32
    %275 = arith.muli %c7_i32, %c8_i32_78 : i32
    %276 = tpu.assume_multiple %275, 8 : i32
    %277 = arith.index_cast %276 : i32 to index
    %c0_79 = arith.constant 0 : index
    %278 = vector.load %arg5[%277, %c0_79] : memref<64x512xf32, #tpu.memory_space<vmem>>, vector<8x512xf32>
    %279 = arith.truncf %269 : vector<8x128xf32> to vector<8x128xbf16>
    %c0_80 = arith.constant 0 : index
    %c0_81 = arith.constant 0 : index
    %280 = vector.load %arg2[%c0_80, %c0_81] : memref<128x512xbf16, #tpu.memory_space<vmem>>, vector<128x512xbf16>
    %cst_82 = arith.constant dense<0.000000e+00> : vector<8x512xf32>
    %281 = tpu.matmul %279, %280, %cst_82 {dimension_numbers = #tpu.dot_dimension_numbers<[1], [0], [0], [1], [0, 0, 1, 1], [], []>} : vector<8x128xbf16>, vector<128x512xbf16>, vector<8x512xf32> -> vector<8x512xf32>
    %282 = arith.addf %278, %281 : vector<8x512xf32>
    %283 = vector.extract_strided_slice %282 {offsets = [0, 0], sizes = [8, 128], strides = [1, 1]} : vector<8x512xf32> to vector<8x128xf32>
    %284 = arith.negf %283 : vector<8x128xf32>
    %285 = math.exp %284 : vector<8x128xf32>
    %cst_83 = arith.constant 1.000000e+00 : f32
    %286 = vector.broadcast %cst_83 : f32 to vector<8x128xf32>
    %287 = arith.addf %286, %285 : vector<8x128xf32>
    %288 = arith.divf %286, %287 : vector<8x128xf32>
    %289 = vector.extract_strided_slice %282 {offsets = [0, 128], sizes = [8, 128], strides = [1, 1]} : vector<8x512xf32> to vector<8x128xf32>
    %290 = arith.negf %289 : vector<8x128xf32>
    %291 = math.exp %290 : vector<8x128xf32>
    %cst_84 = arith.constant 1.000000e+00 : f32
    %292 = vector.broadcast %cst_84 : f32 to vector<8x128xf32>
    %293 = arith.addf %292, %291 : vector<8x128xf32>
    %294 = arith.divf %292, %293 : vector<8x128xf32>
    %295 = vector.extract_strided_slice %282 {offsets = [0, 256], sizes = [8, 128], strides = [1, 1]} : vector<8x512xf32> to vector<8x128xf32>
    %296 = math.tanh %295 : vector<8x128xf32>
    %297 = vector.extract_strided_slice %282 {offsets = [0, 384], sizes = [8, 128], strides = [1, 1]} : vector<8x512xf32> to vector<8x128xf32>
    %298 = arith.negf %297 : vector<8x128xf32>
    %299 = math.exp %298 : vector<8x128xf32>
    %cst_85 = arith.constant 1.000000e+00 : f32
    %300 = vector.broadcast %cst_85 : f32 to vector<8x128xf32>
    %301 = arith.addf %300, %299 : vector<8x128xf32>
    %302 = arith.divf %300, %301 : vector<8x128xf32>
    %303 = arith.mulf %294, %267 : vector<8x128xf32>
    %304 = arith.mulf %288, %296 : vector<8x128xf32>
    %305 = arith.addf %303, %304 : vector<8x128xf32>
    %306 = math.tanh %305 : vector<8x128xf32>
    %307 = arith.mulf %302, %306 : vector<8x128xf32>
    %308 = arith.truncf %307 : vector<8x128xf32> to vector<8x128xbf16>
    %309 = arith.index_cast %c7_i32 : i32 to index
    %c0_86 = arith.constant 0 : index
    %c0_87 = arith.constant 0 : index
    %310 = vector.load %arg4[%309, %c0_86, %c0_87] : memref<8x8x128xbf16, #tpu.memory_space<vmem>>, vector<1x8x128xbf16>
    %311 = vector.shape_cast %310 : vector<1x8x128xbf16> to vector<8x128xbf16>
    %312 = vector.shape_cast %308 : vector<8x128xbf16> to vector<1x8x128xbf16>
    tpu.vector_store %arg4[%309, %c0_86, %c0_87], %312 {strides = array<i32>} : memref<8x8x128xbf16, #tpu.memory_space<vmem>>, vector<1x8x128xbf16>,
    %c8_i32_88 = arith.constant 8 : i32
    return
  }
}

</mosaic_0001>

<llo_original>
// kernel: tpu_custom_call.1
$region0: #{tpu_custom_call.1}
  #allocation0 [shape = 'u32[]', space=smem, size = 0x4, offset = 0x4, fixed_abs, tag = 'smem constant byte address 0x4 - core index']
  #allocation1 [shape = 'u32[144,128]{1,0:T(1,128)}', space=vmem, size = 0x12000, scoped, tag = 'internal scratch']
  #allocation2 [shape = 'f32[64,512]{1,0:T(8,128)}', space=vmem, size = 0x20000, scoped, tag = 'scratch operand']
  %s0 = inlined_call_operand.vmem [shape: bf16[64,32], index: 0, kind: input, shape index: {}]
  %s1 = inlined_call_operand.hbm [shape: bf16[32,512], index: 1, kind: input, shape index: {}]
  %s2 = inlined_call_operand.hbm [shape: bf16[128,512], index: 2, kind: input, shape index: {}]
  %s3 = inlined_call_operand.vmem [shape: f32[1,512], index: 3, kind: input, shape index: {}]
  %s4 = inlined_call_operand.hbm [shape: bf16[8,8,128], index: 4, kind: output, shape index: {}]
  %s5 = sld [smem:[#allocation0]]
  $region34: #{tpu_custom_call.1} parent=0
    _
  %s7 = ssub.s32 1, %s5
  %s8 = scalar_select 0, %s7, %s5
  $region1: #{tpu_custom_call.1} parent=0
    #allocation3 [shape = 'u8[32768]{0}', space=vmem, size = 0x8000, scoped, tag = 'input window, operand 1, single buffered']
    #allocation4 [shape = 's32[1]{0}', space=sflag, size = 0x4, scoped, tag = 'scoped memory for tpu_custom_call.1']
    #allocation5 [shape = 's32[1]{0}', space=sflag, size = 0x4, scoped, tag = 'scoped memory for tpu_custom_call.1']
    #allocation6 [shape = 'u8[131072]{0}', space=vmem, size = 0x20000, scoped, tag = 'input window, operand 2, single buffered']
    #allocation7 [shape = 's32[1]{0}', space=sflag, size = 0x4, scoped, tag = 'scoped memory for tpu_custom_call.1']
    #allocation8 [shape = 'u8[16384]{0}', space=vmem, size = 0x4000, scoped, tag = 'output window, operand 0, single buffered']
    %9 = vsyncpa [#allocation4], 0
    %10 = vsyncpa [#allocation7], 0
    %11 = vsyncpa [#allocation5], 0
    // Predicated region
    $region2: #{tpu_custom_call.1} parent=1 // pred_check
      _
    $region3: #{tpu_custom_call.1} parent=1 // pred_check_branch
      %13 = sbr.rel (0) target = $region5
    $region4: #{tpu_custom_call.1} parent=1 // pred_region
      _
    $region5: #{tpu_custom_call.1} parent=1 // pred_fallthru
      _
    // Predicated region
    $region6: #{tpu_custom_call.1} parent=1 // pred_check
      _
    $region7: #{tpu_custom_call.1} parent=1 // pred_check_branch
      %15 = sbr.rel (0) target = $region9
    $region8: #{tpu_custom_call.1} parent=1 // pred_region
      %s17 = ssub.s32 1024, 1024
      %18 = vsyncadd [#allocation4], %s17
      %s19 = sshll.u32 [#allocation3], 4
      %s20 = int_to_ptr.vmem [resolvable:$true] %s19
      %25 = dma.hbm_to_vmem [thread:$0]  %s1, 1024, %s20, [#allocation4], 256, 256, 16
    $region9: #{tpu_custom_call.1} parent=1 // pred_fallthru
      _
    // Predicated region
    $region10: #{tpu_custom_call.1} parent=1 // pred_check
      _
    $region11: #{tpu_custom_call.1} parent=1 // pred_check_branch
      %27 = sbr.rel (0) target = $region13
    $region12: #{tpu_custom_call.1} parent=1 // pred_region
      %s29 = ssub.s32 4096, 4096
      %30 = vsyncadd [#allocation7], %s29
      %s31 = sshll.u32 [#allocation6], 4
      %s32 = int_to_ptr.vmem [resolvable:$true] %s31
      %37 = dma.hbm_to_vmem [thread:$0]  %s2, 4096, %s32, [#allocation7], 256, 256, 16
    $region13: #{tpu_custom_call.1} parent=1 // pred_fallthru
      _
    // Predicated region
    $region14: #{tpu_custom_call.1} parent=1 // pred_check
      _
    $region15: #{tpu_custom_call.1} parent=1 // pred_check_branch
      %39 = sbr.rel (0) target = $region17
    $region16: #{tpu_custom_call.1} parent=1 // pred_region
      _
    $region17: #{tpu_custom_call.1} parent=1 // pred_fallthru
      _
    // Predicated region
    $region18: #{tpu_custom_call.1} parent=1 // pred_check
      _
    $region19: #{tpu_custom_call.1} parent=1 // pred_check_branch
      %41 = sbr.rel (0) target = $region21
    $region20: #{tpu_custom_call.1} parent=1 // pred_region
      %42 = dma.done [#allocation4], 1024
    $region21: #{tpu_custom_call.1} parent=1 // pred_fallthru
      _
    // Predicated region
    $region22: #{tpu_custom_call.1} parent=1 // pred_check
      _
    $region23: #{tpu_custom_call.1} parent=1 // pred_check_branch
      %44 = sbr.rel (0) target = $region25
    $region24: #{tpu_custom_call.1} parent=1 // pred_region
      %45 = dma.done [#allocation7], 4096
    $region25: #{tpu_custom_call.1} parent=1 // pred_fallthru
      _
    %v47 = vld [vmem:[%s0] sm:$0xf]
    %v48 = vld [vmem:[%s0 + $0x4] sm:$0xf]
    %v49 = vld [vmem:[%s0 + $0x8] sm:$0xf]
    %v50 = vld [vmem:[%s0 + $0xc] sm:$0xf]
    %v51 = vld [vmem:[%s0 + $0x10] sm:$0xf]
    %v52 = vld [vmem:[%s0 + $0x14] sm:$0xf]
    %v53 = vld [vmem:[%s0 + $0x18] sm:$0xf]
    %v54 = vld [vmem:[%s0 + $0x1c] sm:$0xf]
    %v55 = vld [vmem:[#allocation3] sm:$0xff]
    %v56 = vld [vmem:[#allocation3 + $0x8] sm:$0xff]
    %v57 = vld [vmem:[#allocation3 + $0x10] sm:$0xff]
    %v58 = vld [vmem:[#allocation3 + $0x18] sm:$0xff]
    %v59 = vld [vmem:[#allocation3 + $0x20] sm:$0xff]
    %v60 = vld [vmem:[#allocation3 + $0x28] sm:$0xff]
    %v61 = vld [vmem:[#allocation3 + $0x30] sm:$0xff]
    %v62 = vld [vmem:[#allocation3 + $0x38] sm:$0xff]
    %v63 = vld [vmem:[%s3] sm:$0xf]
    %v65 = vlaneseq
    %v66 = vshrl.u32 %v65, 7
    %v67 = vsub.s32 0, %v66
    %v68 = vrot.slane %v63, %v67
    %v69 = vlaneseq
    %v70 = vshrl.u32 %v69, 7
    %v71 = vsub.s32 1, %v70
    %v72 = vrot.slane %v63, %v71
    %v73 = vlaneseq
    %v74 = vshrl.u32 %v73, 7
    %v75 = vsub.s32 2, %v74
    %v76 = vrot.slane %v63, %v75
    %v77 = vlaneseq
    %v78 = vshrl.u32 %v77, 7
    %v79 = vsub.s32 3, %v78
    %v80 = vrot.slane %v63, %v79
    %v93 = vunpack.c.l.b16 %v47
    %v94 = vunpack.c.l.b16 %v48
    %v95 = vunpack.c.l.b16 %v49
    %v96 = vunpack.c.l.b16 %v50
    %v97 = vunpack.c.l.b16 %v51
    %v98 = vunpack.c.l.b16 %v52
    %v99 = vunpack.c.l.b16 %v53
    %v100 = vunpack.c.l.b16 %v54
    %v101 = vpack.c.b16 %v94, %v93
    %v102 = vpack.c.b16 %v96, %v95
    %v103 = vpack.c.b16 %v98, %v97
    %v104 = vpack.c.b16 %v100, %v99
    %v113 = vunpack.c.l.b16 %v55
    %v114 = vunpack.c.h.b16 %v55
    %v115 = vunpack.c.l.b16 %v56
    %v116 = vunpack.c.h.b16 %v56
    %v117 = vunpack.c.l.b16 %v57
    %v118 = vunpack.c.h.b16 %v57
    %v119 = vunpack.c.l.b16 %v58
    %v120 = vunpack.c.h.b16 %v58
    %v121 = vunpack.c.l.b16 %v59
    %v122 = vunpack.c.h.b16 %v59
    %v123 = vunpack.c.l.b16 %v60
    %v124 = vunpack.c.h.b16 %v60
    %v125 = vunpack.c.l.b16 %v61
    %v126 = vunpack.c.h.b16 %v61
    %v127 = vunpack.c.l.b16 %v62
    %v128 = vunpack.c.h.b16 %v62
    %v129 = vpack.c.b16 %v117, %v113
    %v130 = vpack.c.b16 %v118, %v114
    %v131 = vpack.c.b16 %v119, %v115
    %v132 = vpack.c.b16 %v120, %v116
    %v133 = vpack.c.b16 %v125, %v121
    %v134 = vpack.c.b16 %v126, %v122
    %v135 = vpack.c.b16 %v127, %v123
    %v136 = vpack.c.b16 %v128, %v124
    %vm145 = vcmask 261120
    %v147 = vsel %vm145, %v101, 0
    %v150 = vsel %vm145, %v102, 0
    %v153 = vsel %vm145, %v103, 0
    %v156 = vsel %vm145, %v104, 0
    %158 = vmatprep.subr.bf16.mxu0 0
    %159 = vmatpush1.bf16.msra.mxu0 0
    %160 = vmatprep.subr.bf16.mxu0 0
    %161 = vmatpush1.bf16.msra.mxu0 0
    %162 = vmatprep.subr.bf16.mxu0 0
    %163 = vmatpush1.bf16.msra.mxu0 0
    %164 = vmatprep.subr.bf16.mxu0 0
    %165 = vmatpush1.bf16.msra.mxu0 0
    %166 = vmatprep.subr.bf16.mxu0 0
    %167 = vmatpush1.bf16.msra.mxu0 0
    %168 = vmatprep.subr.bf16.mxu0 0
    %169 = vmatpush1.bf16.msra.mxu0 0
    %170 = vmatprep.subr.bf16.mxu0 %v134
    %171 = vmatpush1.bf16.msra.mxu0 %v133
    %172 = vmatprep.subr.bf16.mxu0 %v130
    %173 = vmatpush1.bf16.msra.mxu0 %v129
    %174 = vmatprep.subr.bf16.mxu0 0
    %175 = vmatpush2.bf16.msra.mxu0 0
    %176 = vmatprep.subr.bf16.mxu0 0
    %177 = vmatpush2.bf16.msra.mxu0 0
    %178 = vmatprep.subr.bf16.mxu0 0
    %179 = vmatpush2.bf16.msra.mxu0 0
    %180 = vmatprep.subr.bf16.mxu0 0
    %181 = vmatpush2.bf16.msra.mxu0 0
    %182 = vmatprep.subr.bf16.mxu0 0
    %183 = vmatpush2.bf16.msra.mxu0 0
    %184 = vmatprep.subr.bf16.mxu0 0
    %185 = vmatpush2.bf16.msra.mxu0 0
    %186 = vmatprep.subr.bf16.mxu0 0
    %187 = vmatpush2.bf16.msra.mxu0 0
    %188 = vmatprep.subr.bf16.mxu0 0
    %189 = vmatpush2.bf16.msra.mxu0 0
    %190 = vmatprep.mubr.bf16.mxu0 0
    %191 = vmatmul.mubr.bf16.gmra.mxu0 %v147
    %v192 = vpop.f32.mrf.mxu0
    %v193 = vadd.f32 %v68, %v192
    %v194 = vpop.f32.mrf.mxu0
    %v195 = vadd.f32 %v72, %v194
    %v196 = vpop.f32.mrf.mxu0
    %v197 = vadd.f32 %v68, %v196
    %v198 = vpop.f32.mrf.mxu0
    %v199 = vadd.f32 %v72, %v198
    %200 = vmatprep.mubr.bf16.mxu0 0
    %201 = vmatmul.mubr.bf16.gmra.mxu0 %v150
    %v202 = vpop.f32.mrf.mxu0
    %v203 = vadd.f32 %v68, %v202
    %v204 = vpop.f32.mrf.mxu0
    %v205 = vadd.f32 %v72, %v204
    %v206 = vpop.f32.mrf.mxu0
    %v207 = vadd.f32 %v68, %v206
    %v208 = vpop.f32.mrf.mxu0
    %v209 = vadd.f32 %v72, %v208
    %210 = vmatprep.mubr.bf16.mxu0 0
    %211 = vmatmul.mubr.bf16.gmra.mxu0 %v153
    %v212 = vpop.f32.mrf.mxu0
    %v213 = vadd.f32 %v68, %v212
    %v214 = vpop.f32.mrf.mxu0
    %v215 = vadd.f32 %v72, %v214
    %v216 = vpop.f32.mrf.mxu0
    %v217 = vadd.f32 %v68, %v216
    %v218 = vpop.f32.mrf.mxu0
    %v219 = vadd.f32 %v72, %v218
    %220 = vmatprep.mubr.bf16.mxu0 0
    %221 = vmatmul.mubr.bf16.gmra.mxu0 %v156
    %v222 = vpop.f32.mrf.mxu0
    %v223 = vadd.f32 %v68, %v222
    %v224 = vpop.f32.mrf.mxu0
    %v225 = vadd.f32 %v72, %v224
    %v226 = vpop.f32.mrf.mxu0
    %v227 = vadd.f32 %v68, %v226
    %v228 = vpop.f32.mrf.mxu0
    %v229 = vadd.f32 %v72, %v228
    %230 = vdwg.mxu0
    %231 = vmatprep.subr.bf16.mxu0 0
    %232 = vmatpush1.bf16.msra.mxu0 0
    %233 = vmatprep.subr.bf16.mxu0 0
    %234 = vmatpush1.bf16.msra.mxu0 0
    %235 = vmatprep.subr.bf16.mxu0 0
    %236 = vmatpush1.bf16.msra.mxu0 0
    %237 = vmatprep.subr.bf16.mxu0 0
    %238 = vmatpush1.bf16.msra.mxu0 0
    %239 = vmatprep.subr.bf16.mxu0 0
    %240 = vmatpush1.bf16.msra.mxu0 0
    %241 = vmatprep.subr.bf16.mxu0 0
    %242 = vmatpush1.bf16.msra.mxu0 0
    %243 = vmatprep.subr.bf16.mxu0 %v136
    %244 = vmatpush1.bf16.msra.mxu0 %v135
    %245 = vmatprep.subr.bf16.mxu0 %v132
    %246 = vmatpush1.bf16.msra.mxu0 %v131
    %247 = vmatprep.subr.bf16.mxu0 0
    %248 = vmatpush2.bf16.msra.mxu0 0
    %249 = vmatprep.subr.bf16.mxu0 0
    %250 = vmatpush2.bf16.msra.mxu0 0
    %251 = vmatprep.subr.bf16.mxu0 0
    %252 = vmatpush2.bf16.msra.mxu0 0
    %253 = vmatprep.subr.bf16.mxu0 0
    %254 = vmatpush2.bf16.msra.mxu0 0
    %255 = vmatprep.subr.bf16.mxu0 0
    %256 = vmatpush2.bf16.msra.mxu0 0
    %257 = vmatprep.subr.bf16.mxu0 0
    %258 = vmatpush2.bf16.msra.mxu0 0
    %259 = vmatprep.subr.bf16.mxu0 0
    %260 = vmatpush2.bf16.msra.mxu0 0
    %261 = vmatprep.subr.bf16.mxu0 0
    %262 = vmatpush2.bf16.msra.mxu0 0
    %263 = vmatprep.mubr.bf16.mxu0 0
    %264 = vmatmul.mubr.bf16.gmra.mxu0 %v147
    %v265 = vpop.f32.mrf.mxu0
    %v266 = vadd.f32 %v76, %v265
    %v267 = vpop.f32.mrf.mxu0
    %v268 = vadd.f32 %v80, %v267
    %v269 = vpop.f32.mrf.mxu0
    %v270 = vadd.f32 %v76, %v269
    %v271 = vpop.f32.mrf.mxu0
    %v272 = vadd.f32 %v80, %v271
    %273 = vmatprep.mubr.bf16.mxu0 0
    %274 = vmatmul.mubr.bf16.gmra.mxu0 %v150
    %v275 = vpop.f32.mrf.mxu0
    %v276 = vadd.f32 %v76, %v275
    %v277 = vpop.f32.mrf.mxu0
    %v278 = vadd.f32 %v80, %v277
    %v279 = vpop.f32.mrf.mxu0
    %v280 = vadd.f32 %v76, %v279
    %v281 = vpop.f32.mrf.mxu0
    %v282 = vadd.f32 %v80, %v281
    %283 = vmatprep.mubr.bf16.mxu0 0
    %284 = vmatmul.mubr.bf16.gmra.mxu0 %v153
    %v285 = vpop.f32.mrf.mxu0
    %v286 = vadd.f32 %v76, %v285
    %v287 = vpop.f32.mrf.mxu0
    %v288 = vadd.f32 %v80, %v287
    %v289 = vpop.f32.mrf.mxu0
    %v290 = vadd.f32 %v76, %v289
    %v291 = vpop.f32.mrf.mxu0
    %v292 = vadd.f32 %v80, %v291
    %293 = vmatprep.mubr.bf16.mxu0 0
    %294 = vmatmul.mubr.bf16.gmra.mxu0 %v156
    %v295 = vpop.f32.mrf.mxu0
    %v296 = vadd.f32 %v76, %v295
    %v297 = vpop.f32.mrf.mxu0
    %v298 = vadd.f32 %v80, %v297
    %v299 = vpop.f32.mrf.mxu0
    %v300 = vadd.f32 %v76, %v299
    %v301 = vpop.f32.mrf.mxu0
    %v302 = vadd.f32 %v80, %v301
    %303 = vdwg.mxu0
    %304 = vst [vmem:[#allocation2] sm:$0xff] %v193
    %305 = vst [vmem:[#allocation2 + $0x8] sm:$0xff] %v195
    %306 = vst [vmem:[#allocation2 + $0x10] sm:$0xff] %v266
    %307 = vst [vmem:[#allocation2 + $0x18] sm:$0xff] %v268
    %308 = vst [vmem:[#allocation2 + $0x20] sm:$0xff] %v197
    %309 = vst [vmem:[#allocation2 + $0x28] sm:$0xff] %v199
    %310 = vst [vmem:[#allocation2 + $0x30] sm:$0xff] %v270
    %311 = vst [vmem:[#allocation2 + $0x38] sm:$0xff] %v272
    %312 = vst [vmem:[#allocation2 + $0x40] sm:$0xff] %v203
    %313 = vst [vmem:[#allocation2 + $0x48] sm:$0xff] %v205
    %314 = vst [vmem:[#allocation2 + $0x50] sm:$0xff] %v276
    %315 = vst [vmem:[#allocation2 + $0x58] sm:$0xff] %v278
    %316 = vst [vmem:[#allocation2 + $0x60] sm:$0xff] %v207
    %317 = vst [vmem:[#allocation2 + $0x68] sm:$0xff] %v209
    %318 = vst [vmem:[#allocation2 + $0x70] sm:$0xff] %v280
    %319 = vst [vmem:[#allocation2 + $0x78] sm:$0xff] %v282
    %320 = vst [vmem:[#allocation2 + $0x80] sm:$0xff] %v213
    %321 = vst [vmem:[#allocation2 + $0x88] sm:$0xff] %v215
    %322 = vst [vmem:[#allocation2 + $0x90] sm:$0xff] %v286
    %323 = vst [vmem:[#allocation2 + $0x98] sm:$0xff] %v288
    %324 = vst [vmem:[#allocation2 + $0xa0] sm:$0xff] %v217
    %325 = vst [vmem:[#allocation2 + $0xa8] sm:$0xff] %v219
    %326 = vst [vmem:[#allocation2 + $0xb0] sm:$0xff] %v290
    %327 = vst [vmem:[#allocation2 + $0xb8] sm:$0xff] %v292
    %328 = vst [vmem:[#allocation2 + $0xc0] sm:$0xff] %v223
    %329 = vst [vmem:[#allocation2 + $0xc8] sm:$0xff] %v225
    %330 = vst [vmem:[#allocation2 + $0xd0] sm:$0xff] %v296
    %331 = vst [vmem:[#allocation2 + $0xd8] sm:$0xff] %v298
    %332 = vst [vmem:[#allocation2 + $0xe0] sm:$0xff] %v227
    %333 = vst [vmem:[#allocation2 + $0xe8] sm:$0xff] %v229
    %334 = vst [vmem:[#allocation2 + $0xf0] sm:$0xff] %v300
    %335 = vst [vmem:[#allocation2 + $0xf8] sm:$0xff] %v302
    %s336 = smul.u32 0, 4
    %s337 = smul.addr %s336, 8
    %s338 = scalar_lea.vmem [#allocation2], %s337
    %v339 = vld [vmem:[%s338] sm:$0xff]
    %v340 = vld [vmem:[%s338 + $0x8] sm:$0xff]
    %v341 = vld [vmem:[%s338 + $0x10] sm:$0xff]
    %v342 = vld [vmem:[%s338 + $0x18] sm:$0xff]
    %v343 = vld [vmem:[#allocation6] sm:$0xff]
    %v344 = vld [vmem:[#allocation6 + $0x8] sm:$0xff]
    %v345 = vld [vmem:[#allocation6 + $0x10] sm:$0xff]
    %v346 = vld [vmem:[#allocation6 + $0x18] sm:$0xff]
    %v347 = vld [vmem:[#allocation6 + $0x20] sm:$0xff]
    %v348 = vld [vmem:[#allocation6 + $0x28] sm:$0xff]
    %v349 = vld [vmem:[#allocation6 + $0x30] sm:$0xff]
    %v350 = vld [vmem:[#allocation6 + $0x38] sm:$0xff]
    %v351 = vld [vmem:[#allocation6 + $0x40] sm:$0xff]
    %v352 = vld [vmem:[#allocation6 + $0x48] sm:$0xff]
    %v353 = vld [vmem:[#allocation6 + $0x50] sm:$0xff]
    %v354 = vld [vmem:[#allocation6 + $0x58] sm:$0xff]
    %v355 = vld [vmem:[#allocation6 + $0x60] sm:$0xff]
    %v356 = vld [vmem:[#allocation6 + $0x68] sm:$0xff]
    %v357 = vld [vmem:[#allocation6 + $0x70] sm:$0xff]
    %v358 = vld [vmem:[#allocation6 + $0x78] sm:$0xff]
    %v359 = vld [vmem:[#allocation6 + $0x80] sm:$0xff]
    %v360 = vld [vmem:[#allocation6 + $0x88] sm:$0xff]
    %v361 = vld [vmem:[#allocation6 + $0x90] sm:$0xff]
    %v362 = vld [vmem:[#allocation6 + $0x98] sm:$0xff]
    %v363 = vld [vmem:[#allocation6 + $0xa0] sm:$0xff]
    %v364 = vld [vmem:[#allocation6 + $0xa8] sm:$0xff]
    %v365 = vld [vmem:[#allocation6 + $0xb0] sm:$0xff]
    %v366 = vld [vmem:[#allocation6 + $0xb8] sm:$0xff]
    %v367 = vld [vmem:[#allocation6 + $0xc0] sm:$0xff]
    %v368 = vld [vmem:[#allocation6 + $0xc8] sm:$0xff]
    %v369 = vld [vmem:[#allocation6 + $0xd0] sm:$0xff]
    %v370 = vld [vmem:[#allocation6 + $0xd8] sm:$0xff]
    %v371 = vld [vmem:[#allocation6 + $0xe0] sm:$0xff]
    %v372 = vld [vmem:[#allocation6 + $0xe8] sm:$0xff]
    %v373 = vld [vmem:[#allocation6 + $0xf0] sm:$0xff]
    %v374 = vld [vmem:[#allocation6 + $0xf8] sm:$0xff]
    %v407 = vunpack.c.l.b16 %v343
    %v408 = vunpack.c.h.b16 %v343
    %v409 = vunpack.c.l.b16 %v344
    %v410 = vunpack.c.h.b16 %v344
    %v411 = vunpack.c.l.b16 %v345
    %v412 = vunpack.c.h.b16 %v345
    %v413 = vunpack.c.l.b16 %v346
    %v414 = vunpack.c.h.b16 %v346
    %v415 = vunpack.c.l.b16 %v347
    %v416 = vunpack.c.h.b16 %v347
    %v417 = vunpack.c.l.b16 %v348
    %v418 = vunpack.c.h.b16 %v348
    %v419 = vunpack.c.l.b16 %v349
    %v420 = vunpack.c.h.b16 %v349
    %v421 = vunpack.c.l.b16 %v350
    %v422 = vunpack.c.h.b16 %v350
    %v423 = vunpack.c.l.b16 %v351
    %v424 = vunpack.c.h.b16 %v351
    %v425 = vunpack.c.l.b16 %v352
    %v426 = vunpack.c.h.b16 %v352
    %v427 = vunpack.c.l.b16 %v353
    %v428 = vunpack.c.h.b16 %v353
    %v429 = vunpack.c.l.b16 %v354
    %v430 = vunpack.c.h.b16 %v354
    %v431 = vunpack.c.l.b16 %v355
    %v432 = vunpack.c.h.b16 %v355
    %v433 = vunpack.c.l.b16 %v356
    %v434 = vunpack.c.h.b16 %v356
    %v435 = vunpack.c.l.b16 %v357
    %v436 = vunpack.c.h.b16 %v357
    %v437 = vunpack.c.l.b16 %v358
    %v438 = vunpack.c.h.b16 %v358
    %v439 = vunpack.c.l.b16 %v359
    %v440 = vunpack.c.h.b16 %v359
    %v441 = vunpack.c.l.b16 %v360
    %v442 = vunpack.c.h.b16 %v360
    %v443 = vunpack.c.l.b16 %v361
    %v444 = vunpack.c.h.b16 %v361
    %v445 = vunpack.c.l.b16 %v362
    %v446 = vunpack.c.h.b16 %v362
    %v447 = vunpack.c.l.b16 %v363
    %v448 = vunpack.c.h.b16 %v363
    %v449 = vunpack.c.l.b16 %v364
    %v450 = vunpack.c.h.b16 %v364
    %v451 = vunpack.c.l.b16 %v365
    %v452 = vunpack.c.h.b16 %v365
    %v453 = vunpack.c.l.b16 %v366
    %v454 = vunpack.c.h.b16 %v366
    %v455 = vunpack.c.l.b16 %v367
    %v456 = vunpack.c.h.b16 %v367
    %v457 = vunpack.c.l.b16 %v368
    %v458 = vunpack.c.h.b16 %v368
    %v459 = vunpack.c.l.b16 %v369
    %v460 = vunpack.c.h.b16 %v369
    %v461 = vunpack.c.l.b16 %v370
    %v462 = vunpack.c.h.b16 %v370
    %v463 = vunpack.c.l.b16 %v371
    %v464 = vunpack.c.h.b16 %v371
    %v465 = vunpack.c.l.b16 %v372
    %v466 = vunpack.c.h.b16 %v372
    %v467 = vunpack.c.l.b16 %v373
    %v468 = vunpack.c.h.b16 %v373
    %v469 = vunpack.c.l.b16 %v374
    %v470 = vunpack.c.h.b16 %v374
    %v471 = vpack.c.b16 %v411, %v407
    %v472 = vpack.c.b16 %v412, %v408
    %v473 = vpack.c.b16 %v413, %v409
    %v474 = vpack.c.b16 %v414, %v410
    %v475 = vpack.c.b16 %v419, %v415
    %v476 = vpack.c.b16 %v420, %v416
    %v477 = vpack.c.b16 %v421, %v417
    %v478 = vpack.c.b16 %v422, %v418
    %v479 = vpack.c.b16 %v427, %v423
    %v480 = vpack.c.b16 %v428, %v424
    %v481 = vpack.c.b16 %v429, %v425
    %v482 = vpack.c.b16 %v430, %v426
    %v483 = vpack.c.b16 %v435, %v431
    %v484 = vpack.c.b16 %v436, %v432
    %v485 = vpack.c.b16 %v437, %v433
    %v486 = vpack.c.b16 %v438, %v434
    %v487 = vpack.c.b16 %v443, %v439
    %v488 = vpack.c.b16 %v444, %v440
    %v489 = vpack.c.b16 %v445, %v441
    %v490 = vpack.c.b16 %v446, %v442
    %v491 = vpack.c.b16 %v451, %v447
    %v492 = vpack.c.b16 %v452, %v448
    %v493 = vpack.c.b16 %v453, %v449
    %v494 = vpack.c.b16 %v454, %v450
    %v495 = vpack.c.b16 %v459, %v455
    %v496 = vpack.c.b16 %v460, %v456
    %v497 = vpack.c.b16 %v461, %v457
    %v498 = vpack.c.b16 %v462, %v458
    %v499 = vpack.c.b16 %v467, %v463
    %v500 = vpack.c.b16 %v468, %v464
    %v501 = vpack.c.b16 %v469, %v465
    %v502 = vpack.c.b16 %v470, %v466
    %535 = vmatprep.subr.bf16.mxu0 %v500
    %536 = vmatpush1.bf16.msra.mxu0 %v499
    %537 = vmatprep.subr.bf16.mxu0 %v496
    %538 = vmatpush1.bf16.msra.mxu0 %v495
    %539 = vmatprep.subr.bf16.mxu0 %v492
    %540 = vmatpush1.bf16.msra.mxu0 %v491
    %541 = vmatprep.subr.bf16.mxu0 %v488
    %542 = vmatpush1.bf16.msra.mxu0 %v487
    %543 = vmatprep.subr.bf16.mxu0 %v484
    %544 = vmatpush1.bf16.msra.mxu0 %v483
    %545 = vmatprep.subr.bf16.mxu0 %v480
    %546 = vmatpush1.bf16.msra.mxu0 %v479
    %547 = vmatprep.subr.bf16.mxu0 %v476
    %548 = vmatpush1.bf16.msra.mxu0 %v475
    %549 = vmatprep.subr.bf16.mxu0 %v472
    %550 = vmatpush1.bf16.msra.mxu0 %v471
    %551 = vmatprep.subr.bf16.mxu0 0
    %552 = vmatpush2.bf16.msra.mxu0 0
    %553 = vmatprep.subr.bf16.mxu0 0
    %554 = vmatpush2.bf16.msra.mxu0 0
    %555 = vmatprep.subr.bf16.mxu0 0
    %556 = vmatpush2.bf16.msra.mxu0 0
    %557 = vmatprep.subr.bf16.mxu0 0
    %558 = vmatpush2.bf16.msra.mxu0 0
    %559 = vmatprep.subr.bf16.mxu0 0
    %560 = vmatpush2.bf16.msra.mxu0 0
    %561 = vmatprep.subr.bf16.mxu0 0
    %562 = vmatpush2.bf16.msra.mxu0 0
    %563 = vmatprep.subr.bf16.mxu0 0
    %564 = vmatpush2.bf16.msra.mxu0 0
    %565 = vmatprep.subr.bf16.mxu0 0
    %566 = vmatpush2.bf16.msra.mxu0 0
    %567 = vmatprep.mubr.bf16.mxu0 0
    %568 = vmatmul.mubr.bf16.gmra.mxu0 0
    %v569 = vpop.f32.mrf.mxu0
    %v570 = vadd.f32 0.0, %v569
    %v571 = vpop.f32.mrf.mxu0
    %v572 = vadd.f32 0.0, %v571
    %v573 = vpop.f32.mrf.mxu0
    %v574 = vpop.f32.mrf.mxu0
    %575 = vdwg.mxu0
    %576 = vmatprep.subr.bf16.mxu0 %v502
    %577 = vmatpush1.bf16.msra.mxu0 %v501
    %578 = vmatprep.subr.bf16.mxu0 %v498
    %579 = vmatpush1.bf16.msra.mxu0 %v497
    %580 = vmatprep.subr.bf16.mxu0 %v494
    %581 = vmatpush1.bf16.msra.mxu0 %v493
    %582 = vmatprep.subr.bf16.mxu0 %v490
    %583 = vmatpush1.bf16.msra.mxu0 %v489
    %584 = vmatprep.subr.bf16.mxu0 %v486
    %585 = vmatpush1.bf16.msra.mxu0 %v485
    %586 = vmatprep.subr.bf16.mxu0 %v482
    %587 = vmatpush1.bf16.msra.mxu0 %v481
    %588 = vmatprep.subr.bf16.mxu0 %v478
    %589 = vmatpush1.bf16.msra.mxu0 %v477
    %590 = vmatprep.subr.bf16.mxu0 %v474
    %591 = vmatpush1.bf16.msra.mxu0 %v473
    %592 = vmatprep.subr.bf16.mxu0 0
    %593 = vmatpush2.bf16.msra.mxu0 0
    %594 = vmatprep.subr.bf16.mxu0 0
    %595 = vmatpush2.bf16.msra.mxu0 0
    %596 = vmatprep.subr.bf16.mxu0 0
    %597 = vmatpush2.bf16.msra.mxu0 0
    %598 = vmatprep.subr.bf16.mxu0 0
    %599 = vmatpush2.bf16.msra.mxu0 0
    %600 = vmatprep.subr.bf16.mxu0 0
    %601 = vmatpush2.bf16.msra.mxu0 0
    %602 = vmatprep.subr.bf16.mxu0 0
    %603 = vmatpush2.bf16.msra.mxu0 0
    %604 = vmatprep.subr.bf16.mxu0 0
    %605 = vmatpush2.bf16.msra.mxu0 0
    %606 = vmatprep.subr.bf16.mxu0 0
    %607 = vmatpush2.bf16.msra.mxu0 0
    %608 = vmatprep.mubr.bf16.mxu0 0
    %609 = vmatmul.mubr.bf16.gmra.mxu0 0
    %v610 = vpop.f32.mrf.mxu0
    %v611 = vadd.f32 0.0, %v610
    %v612 = vpop.f32.mrf.mxu0
    %v613 = vadd.f32 0.0, %v612
    %v614 = vpop.f32.mrf.mxu0
    %v615 = vpop.f32.mrf.mxu0
    %616 = vdwg.mxu0
    %v617 = vadd.f32 %v339, %v570
    %v618 = vadd.f32 %v340, %v572
    %v619 = vadd.f32 %v341, %v611
    %v620 = vadd.f32 %v342, %v613
    %v621 = vxor.u32 %v617, 2147483648
    %v622 = vmul.f32 %v621, 1.442695
    %v623 = vpow.pop %v622
    %v624 = vadd.f32 %v623, 1.0
    %v625 = vrcp.pop %v624
    %v626 = vmul.f32 1.0, %v625
    %v627 = vxor.u32 %v618, 2147483648
    %v628 = vmul.f32 %v627, 1.442695
    %v629 = vpow.pop %v628
    %v630 = vadd.f32 %v629, 1.0
    %v631 = vrcp.pop %v630
    %v632 = vmul.f32 1.0, %v631
    %v633 = vtanh.pop %v619
    %v634 = vxor.u32 %v620, 2147483648
    %v635 = vmul.f32 %v634, 1.442695
    %v636 = vpow.pop %v635
    %v637 = vadd.f32 %v636, 1.0
    %v638 = vrcp.pop %v637
    %v639 = vmul.f32 1.0, %v638
    %v640 = vmul.f32 %v632, 0.0
    %v641 = vmul.f32 %v626, %v633
    %v642 = vadd.f32 %v640, %v641
    %v643 = vtanh.pop %v642
    %v644 = vmul.f32 %v639, %v643
    %v645 = vpack.c.bf16 %v644, %v644
    %646 = vst [vmem:[#allocation8] sm:$0xf] %v645
    %s647 = smul.u32 1, 4
    %s648 = smul.addr %s647, 8
    %s649 = scalar_lea.vmem [#allocation2], %s648
    %v650 = vld [vmem:[%s649] sm:$0xff]
    %v651 = vld [vmem:[%s649 + $0x8] sm:$0xff]
    %v652 = vld [vmem:[%s649 + $0x10] sm:$0xff]
    %v653 = vld [vmem:[%s649 + $0x18] sm:$0xff]
    %v654 = vld [vmem:[#allocation6] sm:$0xff]
    %v655 = vld [vmem:[#allocation6 + $0x8] sm:$0xff]
    %v656 = vld [vmem:[#allocation6 + $0x10] sm:$0xff]
    %v657 = vld [vmem:[#allocation6 + $0x18] sm:$0xff]
    %v658 = vld [vmem:[#allocation6 + $0x20] sm:$0xff]
    %v659 = vld [vmem:[#allocation6 + $0x28] sm:$0xff]
    %v660 = vld [vmem:[#allocation6 + $0x30] sm:$0xff]
    %v661 = vld [vmem:[#allocation6 + $0x38] sm:$0xff]
    %v662 = vld [vmem:[#allocation6 + $0x40] sm:$0xff]
    %v663 = vld [vmem:[#allocation6 + $0x48] sm:$0xff]
    %v664 = vld [vmem:[#allocation6 + $0x50] sm:$0xff]
    %v665 = vld [vmem:[#allocation6 + $0x58] sm:$0xff]
    %v666 = vld [vmem:[#allocation6 + $0x60] sm:$0xff]
    %v667 = vld [vmem:[#allocation6 + $0x68] sm:$0xff]
    %v668 = vld [vmem:[#allocation6 + $0x70] sm:$0xff]
    %v669 = vld [vmem:[#allocation6 + $0x78] sm:$0xff]
    %v670 = vld [vmem:[#allocation6 + $0x80] sm:$0xff]
    %v671 = vld [vmem:[#allocation6 + $0x88] sm:$0xff]
    %v672 = vld [vmem:[#allocation6 + $0x90] sm:$0xff]
    %v673 = vld [vmem:[#allocation6 + $0x98] sm:$0xff]
    %v674 = vld [vmem:[#allocation6 + $0xa0] sm:$0xff]
    %v675 = vld [vmem:[#allocation6 + $0xa8] sm:$0xff]
    %v676 = vld [vmem:[#allocation6 + $0xb0] sm:$0xff]
    %v677 = vld [vmem:[#allocation6 + $0xb8] sm:$0xff]
    %v678 = vld [vmem:[#allocation6 + $0xc0] sm:$0xff]
    %v679 = vld [vmem:[#allocation6 + $0xc8] sm:$0xff]
    %v680 = vld [vmem:[#allocation6 + $0xd0] sm:$0xff]
    %v681 = vld [vmem:[#allocation6 + $0xd8] sm:$0xff]
    %v682 = vld [vmem:[#allocation6 + $0xe0] sm:$0xff]
    %v683 = vld [vmem:[#allocation6 + $0xe8] sm:$0xff]
    %v684 = vld [vmem:[#allocation6 + $0xf0] sm:$0xff]
    %v685 = vld [vmem:[#allocation6 + $0xf8] sm:$0xff]
    %v718 = vunpack.c.l.b16 %v654
    %v719 = vunpack.c.h.b16 %v654
    %v720 = vunpack.c.l.b16 %v655
    %v721 = vunpack.c.h.b16 %v655
    %v722 = vunpack.c.l.b16 %v656
    %v723 = vunpack.c.h.b16 %v656
    %v724 = vunpack.c.l.b16 %v657
    %v725 = vunpack.c.h.b16 %v657
    %v726 = vunpack.c.l.b16 %v658
    %v727 = vunpack.c.h.b16 %v658
    %v728 = vunpack.c.l.b16 %v659
    %v729 = vunpack.c.h.b16 %v659
    %v730 = vunpack.c.l.b16 %v660
    %v731 = vunpack.c.h.b16 %v660
    %v732 = vunpack.c.l.b16 %v661
    %v733 = vunpack.c.h.b16 %v661
    %v734 = vunpack.c.l.b16 %v662
    %v735 = vunpack.c.h.b16 %v662
    %v736 = vunpack.c.l.b16 %v663
    %v737 = vunpack.c.h.b16 %v663
    %v738 = vunpack.c.l.b16 %v664
    %v739 = vunpack.c.h.b16 %v664
    %v740 = vunpack.c.l.b16 %v665
    %v741 = vunpack.c.h.b16 %v665
    %v742 = vunpack.c.l.b16 %v666
    %v743 = vunpack.c.h.b16 %v666
    %v744 = vunpack.c.l.b16 %v667
    %v745 = vunpack.c.h.b16 %v667
    %v746 = vunpack.c.l.b16 %v668
    %v747 = vunpack.c.h.b16 %v668
    %v748 = vunpack.c.l.b16 %v669
    %v749 = vunpack.c.h.b16 %v669
    %v750 = vunpack.c.l.b16 %v670
    %v751 = vunpack.c.h.b16 %v670
    %v752 = vunpack.c.l.b16 %v671
    %v753 = vunpack.c.h.b16 %v671
    %v754 = vunpack.c.l.b16 %v672
    %v755 = vunpack.c.h.b16 %v672
    %v756 = vunpack.c.l.b16 %v673
    %v757 = vunpack.c.h.b16 %v673
    %v758 = vunpack.c.l.b16 %v674
    %v759 = vunpack.c.h.b16 %v674
    %v760 = vunpack.c.l.b16 %v675
    %v761 = vunpack.c.h.b16 %v675
    %v762 = vunpack.c.l.b16 %v676
    %v763 = vunpack.c.h.b16 %v676
    %v764 = vunpack.c.l.b16 %v677
    %v765 = vunpack.c.h.b16 %v677
    %v766 = vunpack.c.l.b16 %v678
    %v767 = vunpack.c.h.b16 %v678
    %v768 = vunpack.c.l.b16 %v679
    %v769 = vunpack.c.h.b16 %v679
    %v770 = vunpack.c.l.b16 %v680
    %v771 = vunpack.c.h.b16 %v680
    %v772 = vunpack.c.l.b16 %v681
    %v773 = vunpack.c.h.b16 %v681
    %v774 = vunpack.c.l.b16 %v682
    %v775 = vunpack.c.h.b16 %v682
    %v776 = vunpack.c.l.b16 %v683
    %v777 = vunpack.c.h.b16 %v683
    %v778 = vunpack.c.l.b16 %v684
    %v779 = vunpack.c.h.b16 %v684
    %v780 = vunpack.c.l.b16 %v685
    %v781 = vunpack.c.h.b16 %v685
    %v782 = vpack.c.b16 %v722, %v718
    %v783 = vpack.c.b16 %v723, %v719
    %v784 = vpack.c.b16 %v724, %v720
    %v785 = vpack.c.b16 %v725, %v721
    %v786 = vpack.c.b16 %v730, %v726
    %v787 = vpack.c.b16 %v731, %v727
    %v788 = vpack.c.b16 %v732, %v728
    %v789 = vpack.c.b16 %v733, %v729
    %v790 = vpack.c.b16 %v738, %v734
    %v791 = vpack.c.b16 %v739, %v735
    %v792 = vpack.c.b16 %v740, %v736
    %v793 = vpack.c.b16 %v741, %v737
    %v794 = vpack.c.b16 %v746, %v742
    %v795 = vpack.c.b16 %v747, %v743
    %v796 = vpack.c.b16 %v748, %v744
    %v797 = vpack.c.b16 %v749, %v745
    %v798 = vpack.c.b16 %v754, %v750
    %v799 = vpack.c.b16 %v755, %v751
    %v800 = vpack.c.b16 %v756, %v752
    %v801 = vpack.c.b16 %v757, %v753
    %v802 = vpack.c.b16 %v762, %v758
    %v803 = vpack.c.b16 %v763, %v759
    %v804 = vpack.c.b16 %v764, %v760
    %v805 = vpack.c.b16 %v765, %v761
    %v806 = vpack.c.b16 %v770, %v766
    %v807 = vpack.c.b16 %v771, %v767
    %v808 = vpack.c.b16 %v772, %v768
    %v809 = vpack.c.b16 %v773, %v769
    %v810 = vpack.c.b16 %v778, %v774
    %v811 = vpack.c.b16 %v779, %v775
    %v812 = vpack.c.b16 %v780, %v776
    %v813 = vpack.c.b16 %v781, %v777
    %846 = vmatprep.subr.bf16.mxu0 %v811
    %847 = vmatpush1.bf16.msra.mxu0 %v810
    %848 = vmatprep.subr.bf16.mxu0 %v807
    %849 = vmatpush1.bf16.msra.mxu0 %v806
    %850 = vmatprep.subr.bf16.mxu0 %v803
    %851 = vmatpush1.bf16.msra.mxu0 %v802
    %852 = vmatprep.subr.bf16.mxu0 %v799
    %853 = vmatpush1.bf16.msra.mxu0 %v798
    %854 = vmatprep.subr.bf16.mxu0 %v795
    %855 = vmatpush1.bf16.msra.mxu0 %v794
    %856 = vmatprep.subr.bf16.mxu0 %v791
    %857 = vmatpush1.bf16.msra.mxu0 %v790
    %858 = vmatprep.subr.bf16.mxu0 %v787
    %859 = vmatpush1.bf16.msra.mxu0 %v786
    %860 = vmatprep.subr.bf16.mxu0 %v783
    %861 = vmatpush1.bf16.msra.mxu0 %v782
    %862 = vmatprep.subr.bf16.mxu0 0
    %863 = vmatpush2.bf16.msra.mxu0 0
    %864 = vmatprep.subr.bf16.mxu0 0
    %865 = vmatpush2.bf16.msra.mxu0 0
    %866 = vmatprep.subr.bf16.mxu0 0
    %867 = vmatpush2.bf16.msra.mxu0 0
    %868 = vmatprep.subr.bf16.mxu0 0
    %869 = vmatpush2.bf16.msra.mxu0 0
    %870 = vmatprep.subr.bf16.mxu0 0
    %871 = vmatpush2.bf16.msra.mxu0 0
    %872 = vmatprep.subr.bf16.mxu0 0
    %873 = vmatpush2.bf16.msra.mxu0 0
    %874 = vmatprep.subr.bf16.mxu0 0
    %875 = vmatpush2.bf16.msra.mxu0 0
    %876 = vmatprep.subr.bf16.mxu0 0
    %877 = vmatpush2.bf16.msra.mxu0 0
    %878 = vmatprep.mubr.bf16.mxu0 0
    %879 = vmatmul.mubr.bf16.gmra.mxu0 %v645
    %v880 = vpop.f32.mrf.mxu0
    %v881 = vadd.f32 0.0, %v880
    %v882 = vpop.f32.mrf.mxu0
    %v883 = vadd.f32 0.0, %v882
    %v884 = vpop.f32.mrf.mxu0
    %v885 = vpop.f32.mrf.mxu0
    %886 = vdwg.mxu0
    %887 = vmatprep.subr.bf16.mxu0 %v813
    %888 = vmatpush1.bf16.msra.mxu0 %v812
    %889 = vmatprep.subr.bf16.mxu0 %v809
    %890 = vmatpush1.bf16.msra.mxu0 %v808
    %891 = vmatprep.subr.bf16.mxu0 %v805
    %892 = vmatpush1.bf16.msra.mxu0 %v804
    %893 = vmatprep.subr.bf16.mxu0 %v801
    %894 = vmatpush1.bf16.msra.mxu0 %v800
    %895 = vmatprep.subr.bf16.mxu0 %v797
    %896 = vmatpush1.bf16.msra.mxu0 %v796
    %897 = vmatprep.subr.bf16.mxu0 %v793
    %898 = vmatpush1.bf16.msra.mxu0 %v792
    %899 = vmatprep.subr.bf16.mxu0 %v789
    %900 = vmatpush1.bf16.msra.mxu0 %v788
    %901 = vmatprep.subr.bf16.mxu0 %v785
    %902 = vmatpush1.bf16.msra.mxu0 %v784
    %903 = vmatprep.subr.bf16.mxu0 0
    %904 = vmatpush2.bf16.msra.mxu0 0
    %905 = vmatprep.subr.bf16.mxu0 0
    %906 = vmatpush2.bf16.msra.mxu0 0
    %907 = vmatprep.subr.bf16.mxu0 0
    %908 = vmatpush2.bf16.msra.mxu0 0
    %909 = vmatprep.subr.bf16.mxu0 0
    %910 = vmatpush2.bf16.msra.mxu0 0
    %911 = vmatprep.subr.bf16.mxu0 0
    %912 = vmatpush2.bf16.msra.mxu0 0
    %913 = vmatprep.subr.bf16.mxu0 0
    %914 = vmatpush2.bf16.msra.mxu0 0
    %915 = vmatprep.subr.bf16.mxu0 0
    %916 = vmatpush2.bf16.msra.mxu0 0
    %917 = vmatprep.subr.bf16.mxu0 0
    %918 = vmatpush2.bf16.msra.mxu0 0
    %919 = vmatprep.mubr.bf16.mxu0 0
    %920 = vmatmul.mubr.bf16.gmra.mxu0 %v645
    %v921 = vpop.f32.mrf.mxu0
    %v922 = vadd.f32 0.0, %v921
    %v923 = vpop.f32.mrf.mxu0
    %v924 = vadd.f32 0.0, %v923
    %v925 = vpop.f32.mrf.mxu0
    %v926 = vpop.f32.mrf.mxu0
    %927 = vdwg.mxu0
    %v928 = vadd.f32 %v650, %v881
    %v929 = vadd.f32 %v651, %v883
    %v930 = vadd.f32 %v652, %v922
    %v931 = vadd.f32 %v653, %v924
    %v932 = vxor.u32 %v928, 2147483648
    %v933 = vmul.f32 %v932, 1.442695
    %v934 = vpow.pop %v933
    %v935 = vadd.f32 %v934, 1.0
    %v936 = vrcp.pop %v935
    %v937 = vmul.f32 1.0, %v936
    %v938 = vxor.u32 %v929, 2147483648
    %v939 = vmul.f32 %v938, 1.442695
    %v940 = vpow.pop %v939
    %v941 = vadd.f32 %v940, 1.0
    %v942 = vrcp.pop %v941
    %v943 = vmul.f32 1.0, %v942
    %v944 = vtanh.pop %v930
    %v945 = vxor.u32 %v931, 2147483648
    %v946 = vmul.f32 %v945, 1.442695
    %v947 = vpow.pop %v946
    %v948 = vadd.f32 %v947, 1.0
    %v949 = vrcp.pop %v948
    %v950 = vmul.f32 1.0, %v949
    %v951 = vmul.f32 %v943, %v642
    %v952 = vmul.f32 %v937, %v944
    %v953 = vadd.f32 %v951, %v952
    %v954 = vtanh.pop %v953
    %v955 = vmul.f32 %v950, %v954
    %v956 = vpack.c.bf16 %v955, %v955
    %s957 = scalar_lea.vmem [#allocation8], 4
    %958 = vst [vmem:[%s957] sm:$0xf] %v956
    %s959 = smul.u32 2, 4
    %s960 = smul.addr %s959, 8
    %s961 = scalar_lea.vmem [#allocation2], %s960
    %v962 = vld [vmem:[%s961] sm:$0xff]
    %v963 = vld [vmem:[%s961 + $0x8] sm:$0xff]
    %v964 = vld [vmem:[%s961 + $0x10] sm:$0xff]
    %v965 = vld [vmem:[%s961 + $0x18] sm:$0xff]
    %v966 = vld [vmem:[#allocation6] sm:$0xff]
    %v967 = vld [vmem:[#allocation6 + $0x8] sm:$0xff]
    %v968 = vld [vmem:[#allocation6 + $0x10] sm:$0xff]
    %v969 = vld [vmem:[#allocation6 + $0x18] sm:$0xff]
    %v970 = vld [vmem:[#allocation6 + $0x20] sm:$0xff]
    %v971 = vld [vmem:[#allocation6 + $0x28] sm:$0xff]
    %v972 = vld [vmem:[#allocation6 + $0x30] sm:$0xff]
    %v973 = vld [vmem:[#allocation6 + $0x38] sm:$0xff]
    %v974 = vld [vmem:[#allocation6 + $0x40] sm:$0xff]
    %v975 = vld [vmem:[#allocation6 + $0x48] sm:$0xff]
    %v976 = vld [vmem:[#allocation6 + $0x50] sm:$0xff]
    %v977 = vld [vmem:[#allocation6 + $0x58] sm:$0xff]
    %v978 = vld [vmem:[#allocation6 + $0x60] sm:$0xff]
    %v979 = vld [vmem:[#allocation6 + $0x68] sm:$0xff]
    %v980 = vld [vmem:[#allocation6 + $0x70] sm:$0xff]
    %v981 = vld [vmem:[#allocation6 + $0x78] sm:$0xff]
    %v982 = vld [vmem:[#allocation6 + $0x80] sm:$0xff]
    %v983 = vld [vmem:[#allocation6 + $0x88] sm:$0xff]
    %v984 = vld [vmem:[#allocation6 + $0x90] sm:$0xff]
    %v985 = vld [vmem:[#allocation6 + $0x98] sm:$0xff]
    %v986 = vld [vmem:[#allocation6 + $0xa0] sm:$0xff]
    %v987 = vld [vmem:[#allocation6 + $0xa8] sm:$0xff]
    %v988 = vld [vmem:[#allocation6 + $0xb0] sm:$0xff]
    %v989 = vld [vmem:[#allocation6 + $0xb8] sm:$0xff]
    %v990 = vld [vmem:[#allocation6 + $0xc0] sm:$0xff]
    %v991 = vld [vmem:[#allocation6 + $0xc8] sm:$0xff]
    %v992 = vld [vmem:[#allocation6 + $0xd0] sm:$0xff]
    %v993 = vld [vmem:[#allocation6 + $0xd8] sm:$0xff]
    %v994 = vld [vmem:[#allocation6 + $0xe0] sm:$0xff]
    %v995 = vld [vmem:[#allocation6 + $0xe8] sm:$0xff]
    %v996 = vld [vmem:[#allocation6 + $0xf0] sm:$0xff]
    %v997 = vld [vmem:[#allocation6 + $0xf8] sm:$0xff]
    %v1030 = vunpack.c.l.b16 %v966
    %v1031 = vunpack.c.h.b16 %v966
    %v1032 = vunpack.c.l.b16 %v967
    %v1033 = vunpack.c.h.b16 %v967
    %v1034 = vunpack.c.l.b16 %v968
    %v1035 = vunpack.c.h.b16 %v968
    %v1036 = vunpack.c.l.b16 %v969
    %v1037 = vunpack.c.h.b16 %v969
    %v1038 = vunpack.c.l.b16 %v970
    %v1039 = vunpack.c.h.b16 %v970
    %v1040 = vunpack.c.l.b16 %v971
    %v1041 = vunpack.c.h.b16 %v971
    %v1042 = vunpack.c.l.b16 %v972
    %v1043 = vunpack.c.h.b16 %v972
    %v1044 = vunpack.c.l.b16 %v973
    %v1045 = vunpack.c.h.b16 %v973
    %v1046 = vunpack.c.l.b16 %v974
    %v1047 = vunpack.c.h.b16 %v974
    %v1048 = vunpack.c.l.b16 %v975
    %v1049 = vunpack.c.h.b16 %v975
    %v1050 = vunpack.c.l.b16 %v976
    %v1051 = vunpack.c.h.b16 %v976
    %v1052 = vunpack.c.l.b16 %v977
    %v1053 = vunpack.c.h.b16 %v977
    %v1054 = vunpack.c.l.b16 %v978
    %v1055 = vunpack.c.h.b16 %v978
    %v1056 = vunpack.c.l.b16 %v979
    %v1057 = vunpack.c.h.b16 %v979
    %v1058 = vunpack.c.l.b16 %v980
    %v1059 = vunpack.c.h.b16 %v980
    %v1060 = vunpack.c.l.b16 %v981
    %v1061 = vunpack.c.h.b16 %v981
    %v1062 = vunpack.c.l.b16 %v982
    %v1063 = vunpack.c.h.b16 %v982
    %v1064 = vunpack.c.l.b16 %v983
    %v1065 = vunpack.c.h.b16 %v983
    %v1066 = vunpack.c.l.b16 %v984
    %v1067 = vunpack.c.h.b16 %v984
    %v1068 = vunpack.c.l.b16 %v985
    %v1069 = vunpack.c.h.b16 %v985
    %v1070 = vunpack.c.l.b16 %v986
    %v1071 = vunpack.c.h.b16 %v986
    %v1072 = vunpack.c.l.b16 %v987
    %v1073 = vunpack.c.h.b16 %v987
    %v1074 = vunpack.c.l.b16 %v988
    %v1075 = vunpack.c.h.b16 %v988
    %v1076 = vunpack.c.l.b16 %v989
    %v1077 = vunpack.c.h.b16 %v989
    %v1078 = vunpack.c.l.b16 %v990
    %v1079 = vunpack.c.h.b16 %v990
    %v1080 = vunpack.c.l.b16 %v991
    %v1081 = vunpack.c.h.b16 %v991
    %v1082 = vunpack.c.l.b16 %v992
    %v1083 = vunpack.c.h.b16 %v992
    %v1084 = vunpack.c.l.b16 %v993
    %v1085 = vunpack.c.h.b16 %v993
    %v1086 = vunpack.c.l.b16 %v994
    %v1087 = vunpack.c.h.b16 %v994
    %v1088 = vunpack.c.l.b16 %v995
    %v1089 = vunpack.c.h.b16 %v995
    %v1090 = vunpack.c.l.b16 %v996
    %v1091 = vunpack.c.h.b16 %v996
    %v1092 = vunpack.c.l.b16 %v997
    %v1093 = vunpack.c.h.b16 %v997
    %v1094 = vpack.c.b16 %v1034, %v1030
    %v1095 = vpack.c.b16 %v1035, %v1031
    %v1096 = vpack.c.b16 %v1036, %v1032
    %v1097 = vpack.c.b16 %v1037, %v1033
    %v1098 = vpack.c.b16 %v1042, %v1038
    %v1099 = vpack.c.b16 %v1043, %v1039
    %v1100 = vpack.c.b16 %v1044, %v1040
    %v1101 = vpack.c.b16 %v1045, %v1041
    %v1102 = vpack.c.b16 %v1050, %v1046
    %v1103 = vpack.c.b16 %v1051, %v1047
    %v1104 = vpack.c.b16 %v1052, %v1048
    %v1105 = vpack.c.b16 %v1053, %v1049
    %v1106 = vpack.c.b16 %v1058, %v1054
    %v1107 = vpack.c.b16 %v1059, %v1055
    %v1108 = vpack.c.b16 %v1060, %v1056
    %v1109 = vpack.c.b16 %v1061, %v1057
    %v1110 = vpack.c.b16 %v1066, %v1062
    %v1111 = vpack.c.b16 %v1067, %v1063
    %v1112 = vpack.c.b16 %v1068, %v1064
    %v1113 = vpack.c.b16 %v1069, %v1065
    %v1114 = vpack.c.b16 %v1074, %v1070
    %v1115 = vpack.c.b16 %v1075, %v1071
    %v1116 = vpack.c.b16 %v1076, %v1072
    %v1117 = vpack.c.b16 %v1077, %v1073
    %v1118 = vpack.c.b16 %v1082, %v1078
    %v1119 = vpack.c.b16 %v1083, %v1079
    %v1120 = vpack.c.b16 %v1084, %v1080
    %v1121 = vpack.c.b16 %v1085, %v1081
    %v1122 = vpack.c.b16 %v1090, %v1086
    %v1123 = vpack.c.b16 %v1091, %v1087
    %v1124 = vpack.c.b16 %v1092, %v1088
    %v1125 = vpack.c.b16 %v1093, %v1089
    %1158 = vmatprep.subr.bf16.mxu0 %v1123
    %1159 = vmatpush1.bf16.msra.mxu0 %v1122
    %1160 = vmatprep.subr.bf16.mxu0 %v1119
    %1161 = vmatpush1.bf16.msra.mxu0 %v1118
    %1162 = vmatprep.subr.bf16.mxu0 %v1115
    %1163 = vmatpush1.bf16.msra.mxu0 %v1114
    %1164 = vmatprep.subr.bf16.mxu0 %v1111
    %1165 = vmatpush1.bf16.msra.mxu0 %v1110
    %1166 = vmatprep.subr.bf16.mxu0 %v1107
    %1167 = vmatpush1.bf16.msra.mxu0 %v1106
    %1168 = vmatprep.subr.bf16.mxu0 %v1103
    %1169 = vmatpush1.bf16.msra.mxu0 %v1102
    %1170 = vmatprep.subr.bf16.mxu0 %v1099
    %1171 = vmatpush1.bf16.msra.mxu0 %v1098
    %1172 = vmatprep.subr.bf16.mxu0 %v1095
    %1173 = vmatpush1.bf16.msra.mxu0 %v1094
    %1174 = vmatprep.subr.bf16.mxu0 0
    %1175 = vmatpush2.bf16.msra.mxu0 0
    %1176 = vmatprep.subr.bf16.mxu0 0
    %1177 = vmatpush2.bf16.msra.mxu0 0
    %1178 = vmatprep.subr.bf16.mxu0 0
    %1179 = vmatpush2.bf16.msra.mxu0 0
    %1180 = vmatprep.subr.bf16.mxu0 0
    %1181 = vmatpush2.bf16.msra.mxu0 0
    %1182 = vmatprep.subr.bf16.mxu0 0
    %1183 = vmatpush2.bf16.msra.mxu0 0
    %1184 = vmatprep.subr.bf16.mxu0 0
    %1185 = vmatpush2.bf16.msra.mxu0 0
    %1186 = vmatprep.subr.bf16.mxu0 0
    %1187 = vmatpush2.bf16.msra.mxu0 0
    %1188 = vmatprep.subr.bf16.mxu0 0
    %1189 = vmatpush2.bf16.msra.mxu0 0
    %1190 = vmatprep.mubr.bf16.mxu0 0
    %1191 = vmatmul.mubr.bf16.gmra.mxu0 %v956
    %v1192 = vpop.f32.mrf.mxu0
    %v1193 = vadd.f32 0.0, %v1192
    %v1194 = vpop.f32.mrf.mxu0
    %v1195 = vadd.f32 0.0, %v1194
    %v1196 = vpop.f32.mrf.mxu0
    %v1197 = vpop.f32.mrf.mxu0
    %1198 = vdwg.mxu0
    %1199 = vmatprep.subr.bf16.mxu0 %v1125
    %1200 = vmatpush1.bf16.msra.mxu0 %v1124
    %1201 = vmatprep.subr.bf16.mxu0 %v1121
    %1202 = vmatpush1.bf16.msra.mxu0 %v1120
    %1203 = vmatprep.subr.bf16.mxu0 %v1117
    %1204 = vmatpush1.bf16.msra.mxu0 %v1116
    %1205 = vmatprep.subr.bf16.mxu0 %v1113
    %1206 = vmatpush1.bf16.msra.mxu0 %v1112
    %1207 = vmatprep.subr.bf16.mxu0 %v1109
    %1208 = vmatpush1.bf16.msra.mxu0 %v1108
    %1209 = vmatprep.subr.bf16.mxu0 %v1105
    %1210 = vmatpush1.bf16.msra.mxu0 %v1104
    %1211 = vmatprep.subr.bf16.mxu0 %v1101
    %1212 = vmatpush1.bf16.msra.mxu0 %v1100
    %1213 = vmatprep.subr.bf16.mxu0 %v1097
    %1214 = vmatpush1.bf16.msra.mxu0 %v1096
    %1215 = vmatprep.subr.bf16.mxu0 0
    %1216 = vmatpush2.bf16.msra.mxu0 0
    %1217 = vmatprep.subr.bf16.mxu0 0
    %1218 = vmatpush2.bf16.msra.mxu0 0
    %1219 = vmatprep.subr.bf16.mxu0 0
    %1220 = vmatpush2.bf16.msra.mxu0 0
    %1221 = vmatprep.subr.bf16.mxu0 0
    %1222 = vmatpush2.bf16.msra.mxu0 0
    %1223 = vmatprep.subr.bf16.mxu0 0
    %1224 = vmatpush2.bf16.msra.mxu0 0
    %1225 = vmatprep.subr.bf16.mxu0 0
    %1226 = vmatpush2.bf16.msra.mxu0 0
    %1227 = vmatprep.subr.bf16.mxu0 0
    %1228 = vmatpush2.bf16.msra.mxu0 0
    %1229 = vmatprep.subr.bf16.mxu0 0
    %1230 = vmatpush2.bf16.msra.mxu0 0
    %1231 = vmatprep.mubr.bf16.mxu0 0
    %1232 = vmatmul.mubr.bf16.gmra.mxu0 %v956
    %v1233 = vpop.f32.mrf.mxu0
    %v1234 = vadd.f32 0.0, %v1233
    %v1235 = vpop.f32.mrf.mxu0
    %v1236 = vadd.f32 0.0, %v1235
    %v1237 = vpop.f32.mrf.mxu0
    %v1238 = vpop.f32.mrf.mxu0
    %1239 = vdwg.mxu0
    %v1240 = vadd.f32 %v962, %v1193
    %v1241 = vadd.f32 %v963, %v1195
    %v1242 = vadd.f32 %v964, %v1234
    %v1243 = vadd.f32 %v965, %v1236
    %v1244 = vxor.u32 %v1240, 2147483648
    %v1245 = vmul.f32 %v1244, 1.442695
    %v1246 = vpow.pop %v1245
    %v1247 = vadd.f32 %v1246, 1.0
    %v1248 = vrcp.pop %v1247
    %v1249 = vmul.f32 1.0, %v1248
    %v1250 = vxor.u32 %v1241, 2147483648
    %v1251 = vmul.f32 %v1250, 1.442695
    %v1252 = vpow.pop %v1251
    %v1253 = vadd.f32 %v1252, 1.0
    %v1254 = vrcp.pop %v1253
    %v1255 = vmul.f32 1.0, %v1254
    %v1256 = vtanh.pop %v1242
    %v1257 = vxor.u32 %v1243, 2147483648
    %v1258 = vmul.f32 %v1257, 1.442695
    %v1259 = vpow.pop %v1258
    %v1260 = vadd.f32 %v1259, 1.0
    %v1261 = vrcp.pop %v1260
    %v1262 = vmul.f32 1.0, %v1261
    %v1263 = vmul.f32 %v1255, %v953
    %v1264 = vmul.f32 %v1249, %v1256
    %v1265 = vadd.f32 %v1263, %v1264
    %v1266 = vtanh.pop %v1265
    %v1267 = vmul.f32 %v1262, %v1266
    %v1268 = vpack.c.bf16 %v1267, %v1267
    %s1269 = scalar_lea.vmem [#allocation8], 8
    %1270 = vst [vmem:[%s1269] sm:$0xf] %v1268
    %s1271 = smul.u32 3, 4
    %s1272 = smul.addr %s1271, 8
    %s1273 = scalar_lea.vmem [#allocation2], %s1272
    %v1274 = vld [vmem:[%s1273] sm:$0xff]
    %v1275 = vld [vmem:[%s1273 + $0x8] sm:$0xff]
    %v1276 = vld [vmem:[%s1273 + $0x10] sm:$0xff]
    %v1277 = vld [vmem:[%s1273 + $0x18] sm:$0xff]
    %v1278 = vld [vmem:[#allocation6] sm:$0xff]
    %v1279 = vld [vmem:[#allocation6 + $0x8] sm:$0xff]
    %v1280 = vld [vmem:[#allocation6 + $0x10] sm:$0xff]
    %v1281 = vld [vmem:[#allocation6 + $0x18] sm:$0xff]
    %v1282 = vld [vmem:[#allocation6 + $0x20] sm:$0xff]
    %v1283 = vld [vmem:[#allocation6 + $0x28] sm:$0xff]
    %v1284 = vld [vmem:[#allocation6 + $0x30] sm:$0xff]
    %v1285 = vld [vmem:[#allocation6 + $0x38] sm:$0xff]
    %v1286 = vld [vmem:[#allocation6 + $0x40] sm:$0xff]
    %v1287 = vld [vmem:[#allocation6 + $0x48] sm:$0xff]
    %v1288 = vld [vmem:[#allocation6 + $0x50] sm:$0xff]
    %v1289 = vld [vmem:[#allocation6 + $0x58] sm:$0xff]
    %v1290 = vld [vmem:[#allocation6 + $0x60] sm:$0xff]
    %v1291 = vld [vmem:[#allocation6 + $0x68] sm:$0xff]
    %v1292 = vld [vmem:[#allocation6 + $0x70] sm:$0xff]
    %v1293 = vld [vmem:[#allocation6 + $0x78] sm:$0xff]
    %v1294 = vld [vmem:[#allocation6 + $0x80] sm:$0xff]
    %v1295 = vld [vmem:[#allocation6 + $0x88] sm:$0xff]
    %v1296 = vld [vmem:[#allocation6 + $0x90] sm:$0xff]
    %v1297 = vld [vmem:[#allocation6 + $0x98] sm:$0xff]
    %v1298 = vld [vmem:[#allocation6 + $0xa0] sm:$0xff]
    %v1299 = vld [vmem:[#allocation6 + $0xa8] sm:$0xff]
    %v1300 = vld [vmem:[#allocation6 + $0xb0] sm:$0xff]
    %v1301 = vld [vmem:[#allocation6 + $0xb8] sm:$0xff]
    %v1302 = vld [vmem:[#allocation6 + $0xc0] sm:$0xff]
    %v1303 = vld [vmem:[#allocation6 + $0xc8] sm:$0xff]
    %v1304 = vld [vmem:[#allocation6 + $0xd0] sm:$0xff]
    %v1305 = vld [vmem:[#allocation6 + $0xd8] sm:$0xff]
    %v1306 = vld [vmem:[#allocation6 + $0xe0] sm:$0xff]
    %v1307 = vld [vmem:[#allocation6 + $0xe8] sm:$0xff]
    %v1308 = vld [vmem:[#allocation6 + $0xf0] sm:$0xff]
    %v1309 = vld [vmem:[#allocation6 + $0xf8] sm:$0xff]
    %v1342 = vunpack.c.l.b16 %v1278
    %v1343 = vunpack.c.h.b16 %v1278
    %v1344 = vunpack.c.l.b16 %v1279
    %v1345 = vunpack.c.h.b16 %v1279
    %v1346 = vunpack.c.l.b16 %v1280
    %v1347 = vunpack.c.h.b16 %v1280
    %v1348 = vunpack.c.l.b16 %v1281
    %v1349 = vunpack.c.h.b16 %v1281
    %v1350 = vunpack.c.l.b16 %v1282
    %v1351 = vunpack.c.h.b16 %v1282
    %v1352 = vunpack.c.l.b16 %v1283
    %v1353 = vunpack.c.h.b16 %v1283
    %v1354 = vunpack.c.l.b16 %v1284
    %v1355 = vunpack.c.h.b16 %v1284
    %v1356 = vunpack.c.l.b16 %v1285
    %v1357 = vunpack.c.h.b16 %v1285
    %v1358 = vunpack.c.l.b16 %v1286
    %v1359 = vunpack.c.h.b16 %v1286
    %v1360 = vunpack.c.l.b16 %v1287
    %v1361 = vunpack.c.h.b16 %v1287
    %v1362 = vunpack.c.l.b16 %v1288
    %v1363 = vunpack.c.h.b16 %v1288
    %v1364 = vunpack.c.l.b16 %v1289
    %v1365 = vunpack.c.h.b16 %v1289
    %v1366 = vunpack.c.l.b16 %v1290
    %v1367 = vunpack.c.h.b16 %v1290
    %v1368 = vunpack.c.l.b16 %v1291
    %v1369 = vunpack.c.h.b16 %v1291
    %v1370 = vunpack.c.l.b16 %v1292
    %v1371 = vunpack.c.h.b16 %v1292
    %v1372 = vunpack.c.l.b16 %v1293
    %v1373 = vunpack.c.h.b16 %v1293
    %v1374 = vunpack.c.l.b16 %v1294
    %v1375 = vunpack.c.h.b16 %v1294
    %v1376 = vunpack.c.l.b16 %v1295
    %v1377 = vunpack.c.h.b16 %v1295
    %v1378 = vunpack.c.l.b16 %v1296
    %v1379 = vunpack.c.h.b16 %v1296
    %v1380 = vunpack.c.l.b16 %v1297
    %v1381 = vunpack.c.h.b16 %v1297
    %v1382 = vunpack.c.l.b16 %v1298
    %v1383 = vunpack.c.h.b16 %v1298
    %v1384 = vunpack.c.l.b16 %v1299
    %v1385 = vunpack.c.h.b16 %v1299
    %v1386 = vunpack.c.l.b16 %v1300
    %v1387 = vunpack.c.h.b16 %v1300
    %v1388 = vunpack.c.l.b16 %v1301
    %v1389 = vunpack.c.h.b16 %v1301
    %v1390 = vunpack.c.l.b16 %v1302
    %v1391 = vunpack.c.h.b16 %v1302
    %v1392 = vunpack.c.l.b16 %v1303
    %v1393 = vunpack.c.h.b16 %v1303
    %v1394 = vunpack.c.l.b16 %v1304
    %v1395 = vunpack.c.h.b16 %v1304
    %v1396 = vunpack.c.l.b16 %v1305
    %v1397 = vunpack.c.h.b16 %v1305
    %v1398 = vunpack.c.l.b16 %v1306
    %v1399 = vunpack.c.h.b16 %v1306
    %v1400 = vunpack.c.l.b16 %v1307
    %v1401 = vunpack.c.h.b16 %v1307
    %v1402 = vunpack.c.l.b16 %v1308
    %v1403 = vunpack.c.h.b16 %v1308
    %v1404 = vunpack.c.l.b16 %v1309
    %v1405 = vunpack.c.h.b16 %v1309
    %v1406 = vpack.c.b16 %v1346, %v1342
    %v1407 = vpack.c.b16 %v1347, %v1343
    %v1408 = vpack.c.b16 %v1348, %v1344
    %v1409 = vpack.c.b16 %v1349, %v1345
    %v1410 = vpack.c.b16 %v1354, %v1350
    %v1411 = vpack.c.b16 %v1355, %v1351
    %v1412 = vpack.c.b16 %v1356, %v1352
    %v1413 = vpack.c.b16 %v1357, %v1353
    %v1414 = vpack.c.b16 %v1362, %v1358
    %v1415 = vpack.c.b16 %v1363, %v1359
    %v1416 = vpack.c.b16 %v1364, %v1360
    %v1417 = vpack.c.b16 %v1365, %v1361
    %v1418 = vpack.c.b16 %v1370, %v1366
    %v1419 = vpack.c.b16 %v1371, %v1367
    %v1420 = vpack.c.b16 %v1372, %v1368
    %v1421 = vpack.c.b16 %v1373, %v1369
    %v1422 = vpack.c.b16 %v1378, %v1374
    %v1423 = vpack.c.b16 %v1379, %v1375
    %v1424 = vpack.c.b16 %v1380, %v1376
    %v1425 = vpack.c.b16 %v1381, %v1377
    %v1426 = vpack.c.b16 %v1386, %v1382
    %v1427 = vpack.c.b16 %v1387, %v1383
    %v1428 = vpack.c.b16 %v1388, %v1384
    %v1429 = vpack.c.b16 %v1389, %v1385
    %v1430 = vpack.c.b16 %v1394, %v1390
    %v1431 = vpack.c.b16 %v1395, %v1391
    %v1432 = vpack.c.b16 %v1396, %v1392
    %v1433 = vpack.c.b16 %v1397, %v1393
    %v1434 = vpack.c.b16 %v1402, %v1398
    %v1435 = vpack.c.b16 %v1403, %v1399
    %v1436 = vpack.c.b16 %v1404, %v1400
    %v1437 = vpack.c.b16 %v1405, %v1401
    %1470 = vmatprep.subr.bf16.mxu0 %v1435
    %1471 = vmatpush1.bf16.msra.mxu0 %v1434
    %1472 = vmatprep.subr.bf16.mxu0 %v1431
    %1473 = vmatpush1.bf16.msra.mxu0 %v1430
    %1474 = vmatprep.subr.bf16.mxu0 %v1427
    %1475 = vmatpush1.bf16.msra.mxu0 %v1426
    %1476 = vmatprep.subr.bf16.mxu0 %v1423
    %1477 = vmatpush1.bf16.msra.mxu0 %v1422
    %1478 = vmatprep.subr.bf16.mxu0 %v1419
    %1479 = vmatpush1.bf16.msra.mxu0 %v1418
    %1480 = vmatprep.subr.bf16.mxu0 %v1415
    %1481 = vmatpush1.bf16.msra.mxu0 %v1414
    %1482 = vmatprep.subr.bf16.mxu0 %v1411
    %1483 = vmatpush1.bf16.msra.mxu0 %v1410
    %1484 = vmatprep.subr.bf16.mxu0 %v1407
    %1485 = vmatpush1.bf16.msra.mxu0 %v1406
    %1486 = vmatprep.subr.bf16.mxu0 0
    %1487 = vmatpush2.bf16.msra.mxu0 0
    %1488 = vmatprep.subr.bf16.mxu0 0
    %1489 = vmatpush2.bf16.msra.mxu0 0
    %1490 = vmatprep.subr.bf16.mxu0 0
    %1491 = vmatpush2.bf16.msra.mxu0 0
    %1492 = vmatprep.subr.bf16.mxu0 0
    %1493 = vmatpush2.bf16.msra.mxu0 0
    %1494 = vmatprep.subr.bf16.mxu0 0
    %1495 = vmatpush2.bf16.msra.mxu0 0
    %1496 = vmatprep.subr.bf16.mxu0 0
    %1497 = vmatpush2.bf16.msra.mxu0 0
    %1498 = vmatprep.subr.bf16.mxu0 0
    %1499 = vmatpush2.bf16.msra.mxu0 0
    %1500 = vmatprep.subr.bf16.mxu0 0
    %1501 = vmatpush2.bf16.msra.mxu0 0
    %1502 = vmatprep.mubr.bf16.mxu0 0
    %1503 = vmatmul.mubr.bf16.gmra.mxu0 %v1268
    %v1504 = vpop.f32.mrf.mxu0
    %v1505 = vadd.f32 0.0, %v1504
    %v1506 = vpop.f32.mrf.mxu0
    %v1507 = vadd.f32 0.0, %v1506
    %v1508 = vpop.f32.mrf.mxu0
    %v1509 = vpop.f32.mrf.mxu0
    %1510 = vdwg.mxu0
    %1511 = vmatprep.subr.bf16.mxu0 %v1437
    %1512 = vmatpush1.bf16.msra.mxu0 %v1436
    %1513 = vmatprep.subr.bf16.mxu0 %v1433
    %1514 = vmatpush1.bf16.msra.mxu0 %v1432
    %1515 = vmatprep.subr.bf16.mxu0 %v1429
    %1516 = vmatpush1.bf16.msra.mxu0 %v1428
    %1517 = vmatprep.subr.bf16.mxu0 %v1425
    %1518 = vmatpush1.bf16.msra.mxu0 %v1424
    %1519 = vmatprep.subr.bf16.mxu0 %v1421
    %1520 = vmatpush1.bf16.msra.mxu0 %v1420
    %1521 = vmatprep.subr.bf16.mxu0 %v1417
    %1522 = vmatpush1.bf16.msra.mxu0 %v1416
    %1523 = vmatprep.subr.bf16.mxu0 %v1413
    %1524 = vmatpush1.bf16.msra.mxu0 %v1412
    %1525 = vmatprep.subr.bf16.mxu0 %v1409
    %1526 = vmatpush1.bf16.msra.mxu0 %v1408
    %1527 = vmatprep.subr.bf16.mxu0 0
    %1528 = vmatpush2.bf16.msra.mxu0 0
    %1529 = vmatprep.subr.bf16.mxu0 0
    %1530 = vmatpush2.bf16.msra.mxu0 0
    %1531 = vmatprep.subr.bf16.mxu0 0
    %1532 = vmatpush2.bf16.msra.mxu0 0
    %1533 = vmatprep.subr.bf16.mxu0 0
    %1534 = vmatpush2.bf16.msra.mxu0 0
    %1535 = vmatprep.subr.bf16.mxu0 0
    %1536 = vmatpush2.bf16.msra.mxu0 0
    %1537 = vmatprep.subr.bf16.mxu0 0
    %1538 = vmatpush2.bf16.msra.mxu0 0
    %1539 = vmatprep.subr.bf16.mxu0 0
    %1540 = vmatpush2.bf16.msra.mxu0 0
    %1541 = vmatprep.subr.bf16.mxu0 0
    %1542 = vmatpush2.bf16.msra.mxu0 0
    %1543 = vmatprep.mubr.bf16.mxu0 0
    %1544 = vmatmul.mubr.bf16.gmra.mxu0 %v1268
    %v1545 = vpop.f32.mrf.mxu0
    %v1546 = vadd.f32 0.0, %v1545
    %v1547 = vpop.f32.mrf.mxu0
    %v1548 = vadd.f32 0.0, %v1547
    %v1549 = vpop.f32.mrf.mxu0
    %v1550 = vpop.f32.mrf.mxu0
    %1551 = vdwg.mxu0
    %v1552 = vadd.f32 %v1274, %v1505
    %v1553 = vadd.f32 %v1275, %v1507
    %v1554 = vadd.f32 %v1276, %v1546
    %v1555 = vadd.f32 %v1277, %v1548
    %v1556 = vxor.u32 %v1552, 2147483648
    %v1557 = vmul.f32 %v1556, 1.442695
    %v1558 = vpow.pop %v1557
    %v1559 = vadd.f32 %v1558, 1.0
    %v1560 = vrcp.pop %v1559
    %v1561 = vmul.f32 1.0, %v1560
    %v1562 = vxor.u32 %v1553, 2147483648
    %v1563 = vmul.f32 %v1562, 1.442695
    %v1564 = vpow.pop %v1563
    %v1565 = vadd.f32 %v1564, 1.0
    %v1566 = vrcp.pop %v1565
    %v1567 = vmul.f32 1.0, %v1566
    %v1568 = vtanh.pop %v1554
    %v1569 = vxor.u32 %v1555, 2147483648
    %v1570 = vmul.f32 %v1569, 1.442695
    %v1571 = vpow.pop %v1570
    %v1572 = vadd.f32 %v1571, 1.0
    %v1573 = vrcp.pop %v1572
    %v1574 = vmul.f32 1.0, %v1573
    %v1575 = vmul.f32 %v1567, %v1265
    %v1576 = vmul.f32 %v1561, %v1568
    %v1577 = vadd.f32 %v1575, %v1576
    %v1578 = vtanh.pop %v1577
    %v1579 = vmul.f32 %v1574, %v1578
    %v1580 = vpack.c.bf16 %v1579, %v1579
    %s1581 = scalar_lea.vmem [#allocation8], 12
    %1582 = vst [vmem:[%s1581] sm:$0xf] %v1580
    %s1583 = smul.u32 4, 4
    %s1584 = smul.addr %s1583, 8
    %s1585 = scalar_lea.vmem [#allocation2], %s1584
    %v1586 = vld [vmem:[%s1585] sm:$0xff]
    %v1587 = vld [vmem:[%s1585 + $0x8] sm:$0xff]
    %v1588 = vld [vmem:[%s1585 + $0x10] sm:$0xff]
    %v1589 = vld [vmem:[%s1585 + $0x18] sm:$0xff]
    %v1590 = vld [vmem:[#allocation6] sm:$0xff]
    %v1591 = vld [vmem:[#allocation6 + $0x8] sm:$0xff]
    %v1592 = vld [vmem:[#allocation6 + $0x10] sm:$0xff]
    %v1593 = vld [vmem:[#allocation6 + $0x18] sm:$0xff]
    %v1594 = vld [vmem:[#allocation6 + $0x20] sm:$0xff]
    %v1595 = vld [vmem:[#allocation6 + $0x28] sm:$0xff]
    %v1596 = vld [vmem:[#allocation6 + $0x30] sm:$0xff]
    %v1597 = vld [vmem:[#allocation6 + $0x38] sm:$0xff]
    %v1598 = vld [vmem:[#allocation6 + $0x40] sm:$0xff]
    %v1599 = vld [vmem:[#allocation6 + $0x48] sm:$0xff]
    %v1600 = vld [vmem:[#allocation6 + $0x50] sm:$0xff]
    %v1601 = vld [vmem:[#allocation6 + $0x58] sm:$0xff]
    %v1602 = vld [vmem:[#allocation6 + $0x60] sm:$0xff]
    %v1603 = vld [vmem:[#allocation6 + $0x68] sm:$0xff]
    %v1604 = vld [vmem:[#allocation6 + $0x70] sm:$0xff]
    %v1605 = vld [vmem:[#allocation6 + $0x78] sm:$0xff]
    %v1606 = vld [vmem:[#allocation6 + $0x80] sm:$0xff]
    %v1607 = vld [vmem:[#allocation6 + $0x88] sm:$0xff]
    %v1608 = vld [vmem:[#allocation6 + $0x90] sm:$0xff]
    %v1609 = vld [vmem:[#allocation6 + $0x98] sm:$0xff]
    %v1610 = vld [vmem:[#allocation6 + $0xa0] sm:$0xff]
    %v1611 = vld [vmem:[#allocation6 + $0xa8] sm:$0xff]
    %v1612 = vld [vmem:[#allocation6 + $0xb0] sm:$0xff]
    %v1613 = vld [vmem:[#allocation6 + $0xb8] sm:$0xff]
    %v1614 = vld [vmem:[#allocation6 + $0xc0] sm:$0xff]
    %v1615 = vld [vmem:[#allocation6 + $0xc8] sm:$0xff]
    %v1616 = vld [vmem:[#allocation6 + $0xd0] sm:$0xff]
    %v1617 = vld [vmem:[#allocation6 + $0xd8] sm:$0xff]
    %v1618 = vld [vmem:[#allocation6 + $0xe0] sm:$0xff]
    %v1619 = vld [vmem:[#allocation6 + $0xe8] sm:$0xff]
    %v1620 = vld [vmem:[#allocation6 + $0xf0] sm:$0xff]
    %v1621 = vld [vmem:[#allocation6 + $0xf8] sm:$0xff]
    %v1654 = vunpack.c.l.b16 %v1590
    %v1655 = vunpack.c.h.b16 %v1590
    %v1656 = vunpack.c.l.b16 %v1591
    %v1657 = vunpack.c.h.b16 %v1591
    %v1658 = vunpack.c.l.b16 %v1592
    %v1659 = vunpack.c.h.b16 %v1592
    %v1660 = vunpack.c.l.b16 %v1593
    %v1661 = vunpack.c.h.b16 %v1593
    %v1662 = vunpack.c.l.b16 %v1594
    %v1663 = vunpack.c.h.b16 %v1594
    %v1664 = vunpack.c.l.b16 %v1595
    %v1665 = vunpack.c.h.b16 %v1595
    %v1666 = vunpack.c.l.b16 %v1596
    %v1667 = vunpack.c.h.b16 %v1596
    %v1668 = vunpack.c.l.b16 %v1597
    %v1669 = vunpack.c.h.b16 %v1597
    %v1670 = vunpack.c.l.b16 %v1598
    %v1671 = vunpack.c.h.b16 %v1598
    %v1672 = vunpack.c.l.b16 %v1599
    %v1673 = vunpack.c.h.b16 %v1599
    %v1674 = vunpack.c.l.b16 %v1600
    %v1675 = vunpack.c.h.b16 %v1600
    %v1676 = vunpack.c.l.b16 %v1601
    %v1677 = vunpack.c.h.b16 %v1601
    %v1678 = vunpack.c.l.b16 %v1602
    %v1679 = vunpack.c.h.b16 %v1602
    %v1680 = vunpack.c.l.b16 %v1603
    %v1681 = vunpack.c.h.b16 %v1603
    %v1682 = vunpack.c.l.b16 %v1604
    %v1683 = vunpack.c.h.b16 %v1604
    %v1684 = vunpack.c.l.b16 %v1605
    %v1685 = vunpack.c.h.b16 %v1605
    %v1686 = vunpack.c.l.b16 %v1606
    %v1687 = vunpack.c.h.b16 %v1606
    %v1688 = vunpack.c.l.b16 %v1607
    %v1689 = vunpack.c.h.b16 %v1607
    %v1690 = vunpack.c.l.b16 %v1608
    %v1691 = vunpack.c.h.b16 %v1608
    %v1692 = vunpack.c.l.b16 %v1609
    %v1693 = vunpack.c.h.b16 %v1609
    %v1694 = vunpack.c.l.b16 %v1610
    %v1695 = vunpack.c.h.b16 %v1610
    %v1696 = vunpack.c.l.b16 %v1611
    %v1697 = vunpack.c.h.b16 %v1611
    %v1698 = vunpack.c.l.b16 %v1612
    %v1699 = vunpack.c.h.b16 %v1612
    %v1700 = vunpack.c.l.b16 %v1613
    %v1701 = vunpack.c.h.b16 %v1613
    %v1702 = vunpack.c.l.b16 %v1614
    %v1703 = vunpack.c.h.b16 %v1614
    %v1704 = vunpack.c.l.b16 %v1615
    %v1705 = vunpack.c.h.b16 %v1615
    %v1706 = vunpack.c.l.b16 %v1616
    %v1707 = vunpack.c.h.b16 %v1616
    %v1708 = vunpack.c.l.b16 %v1617
    %v1709 = vunpack.c.h.b16 %v1617
    %v1710 = vunpack.c.l.b16 %v1618
    %v1711 = vunpack.c.h.b16 %v1618
    %v1712 = vunpack.c.l.b16 %v1619
    %v1713 = vunpack.c.h.b16 %v1619
    %v1714 = vunpack.c.l.b16 %v1620
    %v1715 = vunpack.c.h.b16 %v1620
    %v1716 = vunpack.c.l.b16 %v1621
    %v1717 = vunpack.c.h.b16 %v1621
    %v1718 = vpack.c.b16 %v1658, %v1654
    %v1719 = vpack.c.b16 %v1659, %v1655
    %v1720 = vpack.c.b16 %v1660, %v1656
    %v1721 = vpack.c.b16 %v1661, %v1657
    %v1722 = vpack.c.b16 %v1666, %v1662
    %v1723 = vpack.c.b16 %v1667, %v1663
    %v1724 = vpack.c.b16 %v1668, %v1664
    %v1725 = vpack.c.b16 %v1669, %v1665
    %v1726 = vpack.c.b16 %v1674, %v1670
    %v1727 = vpack.c.b16 %v1675, %v1671
    %v1728 = vpack.c.b16 %v1676, %v1672
    %v1729 = vpack.c.b16 %v1677, %v1673
    %v1730 = vpack.c.b16 %v1682, %v1678
    %v1731 = vpack.c.b16 %v1683, %v1679
    %v1732 = vpack.c.b16 %v1684, %v1680
    %v1733 = vpack.c.b16 %v1685, %v1681
    %v1734 = vpack.c.b16 %v1690, %v1686
    %v1735 = vpack.c.b16 %v1691, %v1687
    %v1736 = vpack.c.b16 %v1692, %v1688
    %v1737 = vpack.c.b16 %v1693, %v1689
    %v1738 = vpack.c.b16 %v1698, %v1694
    %v1739 = vpack.c.b16 %v1699, %v1695
    %v1740 = vpack.c.b16 %v1700, %v1696
    %v1741 = vpack.c.b16 %v1701, %v1697
    %v1742 = vpack.c.b16 %v1706, %v1702
    %v1743 = vpack.c.b16 %v1707, %v1703
    %v1744 = vpack.c.b16 %v1708, %v1704
    %v1745 = vpack.c.b16 %v1709, %v1705
    %v1746 = vpack.c.b16 %v1714, %v1710
    %v1747 = vpack.c.b16 %v1715, %v1711
    %v1748 = vpack.c.b16 %v1716, %v1712
    %v1749 = vpack.c.b16 %v1717, %v1713
    %1782 = vmatprep.subr.bf16.mxu0 %v1747
    %1783 = vmatpush1.bf16.msra.mxu0 %v1746
    %1784 = vmatprep.subr.bf16.mxu0 %v1743
    %1785 = vmatpush1.bf16.msra.mxu0 %v1742
    %1786 = vmatprep.subr.bf16.mxu0 %v1739
    %1787 = vmatpush1.bf16.msra.mxu0 %v1738
    %1788 = vmatprep.subr.bf16.mxu0 %v1735
    %1789 = vmatpush1.bf16.msra.mxu0 %v1734
    %1790 = vmatprep.subr.bf16.mxu0 %v1731
    %1791 = vmatpush1.bf16.msra.mxu0 %v1730
    %1792 = vmatprep.subr.bf16.mxu0 %v1727
    %1793 = vmatpush1.bf16.msra.mxu0 %v1726
    %1794 = vmatprep.subr.bf16.mxu0 %v1723
    %1795 = vmatpush1.bf16.msra.mxu0 %v1722
    %1796 = vmatprep.subr.bf16.mxu0 %v1719
    %1797 = vmatpush1.bf16.msra.mxu0 %v1718
    %1798 = vmatprep.subr.bf16.mxu0 0
    %1799 = vmatpush2.bf16.msra.mxu0 0
    %1800 = vmatprep.subr.bf16.mxu0 0
    %1801 = vmatpush2.bf16.msra.mxu0 0
    %1802 = vmatprep.subr.bf16.mxu0 0
    %1803 = vmatpush2.bf16.msra.mxu0 0
    %1804 = vmatprep.subr.bf16.mxu0 0
    %1805 = vmatpush2.bf16.msra.mxu0 0
    %1806 = vmatprep.subr.bf16.mxu0 0
    %1807 = vmatpush2.bf16.msra.mxu0 0
    %1808 = vmatprep.subr.bf16.mxu0 0
    %1809 = vmatpush2.bf16.msra.mxu0 0
    %1810 = vmatprep.subr.bf16.mxu0 0
    %1811 = vmatpush2.bf16.msra.mxu0 0
    %1812 = vmatprep.subr.bf16.mxu0 0
    %1813 = vmatpush2.bf16.msra.mxu0 0
    %1814 = vmatprep.mubr.bf16.mxu0 0
    %1815 = vmatmul.mubr.bf16.gmra.mxu0 %v1580
    %v1816 = vpop.f32.mrf.mxu0
    %v1817 = vadd.f32 0.0, %v1816
    %v1818 = vpop.f32.mrf.mxu0
    %v1819 = vadd.f32 0.0, %v1818
    %v1820 = vpop.f32.mrf.mxu0
    %v1821 = vpop.f32.mrf.mxu0
    %1822 = vdwg.mxu0
    %1823 = vmatprep.subr.bf16.mxu0 %v1749
    %1824 = vmatpush1.bf16.msra.mxu0 %v1748
    %1825 = vmatprep.subr.bf16.mxu0 %v1745
    %1826 = vmatpush1.bf16.msra.mxu0 %v1744
    %1827 = vmatprep.subr.bf16.mxu0 %v1741
    %1828 = vmatpush1.bf16.msra.mxu0 %v1740
    %1829 = vmatprep.subr.bf16.mxu0 %v1737
    %1830 = vmatpush1.bf16.msra.mxu0 %v1736
    %1831 = vmatprep.subr.bf16.mxu0 %v1733
    %1832 = vmatpush1.bf16.msra.mxu0 %v1732
    %1833 = vmatprep.subr.bf16.mxu0 %v1729
    %1834 = vmatpush1.bf16.msra.mxu0 %v1728
    %1835 = vmatprep.subr.bf16.mxu0 %v1725
    %1836 = vmatpush1.bf16.msra.mxu0 %v1724
    %1837 = vmatprep.subr.bf16.mxu0 %v1721
    %1838 = vmatpush1.bf16.msra.mxu0 %v1720
    %1839 = vmatprep.subr.bf16.mxu0 0
    %1840 = vmatpush2.bf16.msra.mxu0 0
    %1841 = vmatprep.subr.bf16.mxu0 0
    %1842 = vmatpush2.bf16.msra.mxu0 0
    %1843 = vmatprep.subr.bf16.mxu0 0
    %1844 = vmatpush2.bf16.msra.mxu0 0
    %1845 = vmatprep.subr.bf16.mxu0 0
    %1846 = vmatpush2.bf16.msra.mxu0 0
    %1847 = vmatprep.subr.bf16.mxu0 0
    %1848 = vmatpush2.bf16.msra.mxu0 0
    %1849 = vmatprep.subr.bf16.mxu0 0
    %1850 = vmatpush2.bf16.msra.mxu0 0
    %1851 = vmatprep.subr.bf16.mxu0 0
    %1852 = vmatpush2.bf16.msra.mxu0 0
    %1853 = vmatprep.subr.bf16.mxu0 0
    %1854 = vmatpush2.bf16.msra.mxu0 0
    %1855 = vmatprep.mubr.bf16.mxu0 0
    %1856 = vmatmul.mubr.bf16.gmra.mxu0 %v1580
    %v1857 = vpop.f32.mrf.mxu0
    %v1858 = vadd.f32 0.0, %v1857
    %v1859 = vpop.f32.mrf.mxu0
    %v1860 = vadd.f32 0.0, %v1859
    %v1861 = vpop.f32.mrf.mxu0
    %v1862 = vpop.f32.mrf.mxu0
    %1863 = vdwg.mxu0
    %v1864 = vadd.f32 %v1586, %v1817
    %v1865 = vadd.f32 %v1587, %v1819
    %v1866 = vadd.f32 %v1588, %v1858
    %v1867 = vadd.f32 %v1589, %v1860
    %v1868 = vxor.u32 %v1864, 2147483648
    %v1869 = vmul.f32 %v1868, 1.442695
    %v1870 = vpow.pop %v1869
    %v1871 = vadd.f32 %v1870, 1.0
    %v1872 = vrcp.pop %v1871
    %v1873 = vmul.f32 1.0, %v1872
    %v1874 = vxor.u32 %v1865, 2147483648
    %v1875 = vmul.f32 %v1874, 1.442695
    %v1876 = vpow.pop %v1875
    %v1877 = vadd.f32 %v1876, 1.0
    %v1878 = vrcp.pop %v1877
    %v1879 = vmul.f32 1.0, %v1878
    %v1880 = vtanh.pop %v1866
    %v1881 = vxor.u32 %v1867, 2147483648
    %v1882 = vmul.f32 %v1881, 1.442695
    %v1883 = vpow.pop %v1882
    %v1884 = vadd.f32 %v1883, 1.0
    %v1885 = vrcp.pop %v1884
    %v1886 = vmul.f32 1.0, %v1885
    %v1887 = vmul.f32 %v1879, %v1577
    %v1888 = vmul.f32 %v1873, %v1880
    %v1889 = vadd.f32 %v1887, %v1888
    %v1890 = vtanh.pop %v1889
    %v1891 = vmul.f32 %v1886, %v1890
    %v1892 = vpack.c.bf16 %v1891, %v1891
    %s1893 = scalar_lea.vmem [#allocation8], 16
    %1894 = vst [vmem:[%s1893] sm:$0xf] %v1892
    %s1895 = smul.u32 5, 4
    %s1896 = smul.addr %s1895, 8
    %s1897 = scalar_lea.vmem [#allocation2], %s1896
    %v1898 = vld [vmem:[%s1897] sm:$0xff]
    %v1899 = vld [vmem:[%s1897 + $0x8] sm:$0xff]
    %v1900 = vld [vmem:[%s1897 + $0x10] sm:$0xff]
    %v1901 = vld [vmem:[%s1897 + $0x18] sm:$0xff]
    %v1902 = vld [vmem:[#allocation6] sm:$0xff]
    %v1903 = vld [vmem:[#allocation6 + $0x8] sm:$0xff]
    %v1904 = vld [vmem:[#allocation6 + $0x10] sm:$0xff]
    %v1905 = vld [vmem:[#allocation6 + $0x18] sm:$0xff]
    %v1906 = vld [vmem:[#allocation6 + $0x20] sm:$0xff]
    %v1907 = vld [vmem:[#allocation6 + $0x28] sm:$0xff]
    %v1908 = vld [vmem:[#allocation6 + $0x30] sm:$0xff]
    %v1909 = vld [vmem:[#allocation6 + $0x38] sm:$0xff]
    %v1910 = vld [vmem:[#allocation6 + $0x40] sm:$0xff]
    %v1911 = vld [vmem:[#allocation6 + $0x48] sm:$0xff]
    %v1912 = vld [vmem:[#allocation6 + $0x50] sm:$0xff]
    %v1913 = vld [vmem:[#allocation6 + $0x58] sm:$0xff]
    %v1914 = vld [vmem:[#allocation6 + $0x60] sm:$0xff]
    %v1915 = vld [vmem:[#allocation6 + $0x68] sm:$0xff]
    %v1916 = vld [vmem:[#allocation6 + $0x70] sm:$0xff]
    %v1917 = vld [vmem:[#allocation6 + $0x78] sm:$0xff]
    %v1918 = vld [vmem:[#allocation6 + $0x80] sm:$0xff]
    %v1919 = vld [vmem:[#allocation6 + $0x88] sm:$0xff]
    %v1920 = vld [vmem:[#allocation6 + $0x90] sm:$0xff]
    %v1921 = vld [vmem:[#allocation6 + $0x98] sm:$0xff]
    %v1922 = vld [vmem:[#allocation6 + $0xa0] sm:$0xff]
    %v1923 = vld [vmem:[#allocation6 + $0xa8] sm:$0xff]
    %v1924 = vld [vmem:[#allocation6 + $0xb0] sm:$0xff]
    %v1925 = vld [vmem:[#allocation6 + $0xb8] sm:$0xff]
    %v1926 = vld [vmem:[#allocation6 + $0xc0] sm:$0xff]
    %v1927 = vld [vmem:[#allocation6 + $0xc8] sm:$0xff]
    %v1928 = vld [vmem:[#allocation6 + $0xd0] sm:$0xff]
    %v1929 = vld [vmem:[#allocation6 + $0xd8] sm:$0xff]
    %v1930 = vld [vmem:[#allocation6 + $0xe0] sm:$0xff]
    %v1931 = vld [vmem:[#allocation6 + $0xe8] sm:$0xff]
    %v1932 = vld [vmem:[#allocation6 + $0xf0] sm:$0xff]
    %v1933 = vld [vmem:[#allocation6 + $0xf8] sm:$0xff]
    %v1966 = vunpack.c.l.b16 %v1902
    %v1967 = vunpack.c.h.b16 %v1902
    %v1968 = vunpack.c.l.b16 %v1903
    %v1969 = vunpack.c.h.b16 %v1903
    %v1970 = vunpack.c.l.b16 %v1904
    %v1971 = vunpack.c.h.b16 %v1904
    %v1972 = vunpack.c.l.b16 %v1905
    %v1973 = vunpack.c.h.b16 %v1905
    %v1974 = vunpack.c.l.b16 %v1906
    %v1975 = vunpack.c.h.b16 %v1906
    %v1976 = vunpack.c.l.b16 %v1907
    %v1977 = vunpack.c.h.b16 %v1907
    %v1978 = vunpack.c.l.b16 %v1908
    %v1979 = vunpack.c.h.b16 %v1908
    %v1980 = vunpack.c.l.b16 %v1909
    %v1981 = vunpack.c.h.b16 %v1909
    %v1982 = vunpack.c.l.b16 %v1910
    %v1983 = vunpack.c.h.b16 %v1910
    %v1984 = vunpack.c.l.b16 %v1911
    %v1985 = vunpack.c.h.b16 %v1911
    %v1986 = vunpack.c.l.b16 %v1912
    %v1987 = vunpack.c.h.b16 %v1912
    %v1988 = vunpack.c.l.b16 %v1913
    %v1989 = vunpack.c.h.b16 %v1913
    %v1990 = vunpack.c.l.b16 %v1914
    %v1991 = vunpack.c.h.b16 %v1914
    %v1992 = vunpack.c.l.b16 %v1915
    %v1993 = vunpack.c.h.b16 %v1915
    %v1994 = vunpack.c.l.b16 %v1916
    %v1995 = vunpack.c.h.b16 %v1916
    %v1996 = vunpack.c.l.b16 %v1917
    %v1997 = vunpack.c.h.b16 %v1917
    %v1998 = vunpack.c.l.b16 %v1918
    %v1999 = vunpack.c.h.b16 %v1918
    %v2000 = vunpack.c.l.b16 %v1919
    %v2001 = vunpack.c.h.b16 %v1919
    %v2002 = vunpack.c.l.b16 %v1920
    %v2003 = vunpack.c.h.b16 %v1920
    %v2004 = vunpack.c.l.b16 %v1921
    %v2005 = vunpack.c.h.b16 %v1921
    %v2006 = vunpack.c.l.b16 %v1922
    %v2007 = vunpack.c.h.b16 %v1922
    %v2008 = vunpack.c.l.b16 %v1923
    %v2009 = vunpack.c.h.b16 %v1923
    %v2010 = vunpack.c.l.b16 %v1924
    %v2011 = vunpack.c.h.b16 %v1924
    %v2012 = vunpack.c.l.b16 %v1925
    %v2013 = vunpack.c.h.b16 %v1925
    %v2014 = vunpack.c.l.b16 %v1926
    %v2015 = vunpack.c.h.b16 %v1926
    %v2016 = vunpack.c.l.b16 %v1927
    %v2017 = vunpack.c.h.b16 %v1927
    %v2018 = vunpack.c.l.b16 %v1928
    %v2019 = vunpack.c.h.b16 %v1928
    %v2020 = vunpack.c.l.b16 %v1929
    %v2021 = vunpack.c.h.b16 %v1929
    %v2022 = vunpack.c.l.b16 %v1930
    %v2023 = vunpack.c.h.b16 %v1930
    %v2024 = vunpack.c.l.b16 %v1931
    %v2025 = vunpack.c.h.b16 %v1931
    %v2026 = vunpack.c.l.b16 %v1932
    %v2027 = vunpack.c.h.b16 %v1932
    %v2028 = vunpack.c.l.b16 %v1933
    %v2029 = vunpack.c.h.b16 %v1933
    %v2030 = vpack.c.b16 %v1970, %v1966
    %v2031 = vpack.c.b16 %v1971, %v1967
    %v2032 = vpack.c.b16 %v1972, %v1968
    %v2033 = vpack.c.b16 %v1973, %v1969
    %v2034 = vpack.c.b16 %v1978, %v1974
    %v2035 = vpack.c.b16 %v1979, %v1975
    %v2036 = vpack.c.b16 %v1980, %v1976
    %v2037 = vpack.c.b16 %v1981, %v1977
    %v2038 = vpack.c.b16 %v1986, %v1982
    %v2039 = vpack.c.b16 %v1987, %v1983
    %v2040 = vpack.c.b16 %v1988, %v1984
    %v2041 = vpack.c.b16 %v1989, %v1985
    %v2042 = vpack.c.b16 %v1994, %v1990
    %v2043 = vpack.c.b16 %v1995, %v1991
    %v2044 = vpack.c.b16 %v1996, %v1992
    %v2045 = vpack.c.b16 %v1997, %v1993
    %v2046 = vpack.c.b16 %v2002, %v1998
    %v2047 = vpack.c.b16 %v2003, %v1999
    %v2048 = vpack.c.b16 %v2004, %v2000
    %v2049 = vpack.c.b16 %v2005, %v2001
    %v2050 = vpack.c.b16 %v2010, %v2006
    %v2051 = vpack.c.b16 %v2011, %v2007
    %v2052 = vpack.c.b16 %v2012, %v2008
    %v2053 = vpack.c.b16 %v2013, %v2009
    %v2054 = vpack.c.b16 %v2018, %v2014
    %v2055 = vpack.c.b16 %v2019, %v2015
    %v2056 = vpack.c.b16 %v2020, %v2016
    %v2057 = vpack.c.b16 %v2021, %v2017
    %v2058 = vpack.c.b16 %v2026, %v2022
    %v2059 = vpack.c.b16 %v2027, %v2023
    %v2060 = vpack.c.b16 %v2028, %v2024
    %v2061 = vpack.c.b16 %v2029, %v2025
    %2094 = vmatprep.subr.bf16.mxu0 %v2059
    %2095 = vmatpush1.bf16.msra.mxu0 %v2058
    %2096 = vmatprep.subr.bf16.mxu0 %v2055
    %2097 = vmatpush1.bf16.msra.mxu0 %v2054
    %2098 = vmatprep.subr.bf16.mxu0 %v2051
    %2099 = vmatpush1.bf16.msra.mxu0 %v2050
    %2100 = vmatprep.subr.bf16.mxu0 %v2047
    %2101 = vmatpush1.bf16.msra.mxu0 %v2046
    %2102 = vmatprep.subr.bf16.mxu0 %v2043
    %2103 = vmatpush1.bf16.msra.mxu0 %v2042
    %2104 = vmatprep.subr.bf16.mxu0 %v2039
    %2105 = vmatpush1.bf16.msra.mxu0 %v2038
    %2106 = vmatprep.subr.bf16.mxu0 %v2035
    %2107 = vmatpush1.bf16.msra.mxu0 %v2034
    %2108 = vmatprep.subr.bf16.mxu0 %v2031
    %2109 = vmatpush1.bf16.msra.mxu0 %v2030
    %2110 = vmatprep.subr.bf16.mxu0 0
    %2111 = vmatpush2.bf16.msra.mxu0 0
    %2112 = vmatprep.subr.bf16.mxu0 0
    %2113 = vmatpush2.bf16.msra.mxu0 0
    %2114 = vmatprep.subr.bf16.mxu0 0
    %2115 = vmatpush2.bf16.msra.mxu0 0
    %2116 = vmatprep.subr.bf16.mxu0 0
    %2117 = vmatpush2.bf16.msra.mxu0 0
    %2118 = vmatprep.subr.bf16.mxu0 0
    %2119 = vmatpush2.bf16.msra.mxu0 0
    %2120 = vmatprep.subr.bf16.mxu0 0
    %2121 = vmatpush2.bf16.msra.mxu0 0
    %2122 = vmatprep.subr.bf16.mxu0 0
    %2123 = vmatpush2.bf16.msra.mxu0 0
    %2124 = vmatprep.subr.bf16.mxu0 0
    %2125 = vmatpush2.bf16.msra.mxu0 0
    %2126 = vmatprep.mubr.bf16.mxu0 0
    %2127 = vmatmul.mubr.bf16.gmra.mxu0 %v1892
    %v2128 = vpop.f32.mrf.mxu0
    %v2129 = vadd.f32 0.0, %v2128
    %v2130 = vpop.f32.mrf.mxu0
    %v2131 = vadd.f32 0.0, %v2130
    %v2132 = vpop.f32.mrf.mxu0
    %v2133 = vpop.f32.mrf.mxu0
    %2134 = vdwg.mxu0
    %2135 = vmatprep.subr.bf16.mxu0 %v2061
    %2136 = vmatpush1.bf16.msra.mxu0 %v2060
    %2137 = vmatprep.subr.bf16.mxu0 %v2057
    %2138 = vmatpush1.bf16.msra.mxu0 %v2056
    %2139 = vmatprep.subr.bf16.mxu0 %v2053
    %2140 = vmatpush1.bf16.msra.mxu0 %v2052
    %2141 = vmatprep.subr.bf16.mxu0 %v2049
    %2142 = vmatpush1.bf16.msra.mxu0 %v2048
    %2143 = vmatprep.subr.bf16.mxu0 %v2045
    %2144 = vmatpush1.bf16.msra.mxu0 %v2044
    %2145 = vmatprep.subr.bf16.mxu0 %v2041
    %2146 = vmatpush1.bf16.msra.mxu0 %v2040
    %2147 = vmatprep.subr.bf16.mxu0 %v2037
    %2148 = vmatpush1.bf16.msra.mxu0 %v2036
    %2149 = vmatprep.subr.bf16.mxu0 %v2033
    %2150 = vmatpush1.bf16.msra.mxu0 %v2032
    %2151 = vmatprep.subr.bf16.mxu0 0
    %2152 = vmatpush2.bf16.msra.mxu0 0
    %2153 = vmatprep.subr.bf16.mxu0 0
    %2154 = vmatpush2.bf16.msra.mxu0 0
    %2155 = vmatprep.subr.bf16.mxu0 0
    %2156 = vmatpush2.bf16.msra.mxu0 0
    %2157 = vmatprep.subr.bf16.mxu0 0
    %2158 = vmatpush2.bf16.msra.mxu0 0
    %2159 = vmatprep.subr.bf16.mxu0 0
    %2160 = vmatpush2.bf16.msra.mxu0 0
    %2161 = vmatprep.subr.bf16.mxu0 0
    %2162 = vmatpush2.bf16.msra.mxu0 0
    %2163 = vmatprep.subr.bf16.mxu0 0
    %2164 = vmatpush2.bf16.msra.mxu0 0
    %2165 = vmatprep.subr.bf16.mxu0 0
    %2166 = vmatpush2.bf16.msra.mxu0 0
    %2167 = vmatprep.mubr.bf16.mxu0 0
    %2168 = vmatmul.mubr.bf16.gmra.mxu0 %v1892
    %v2169 = vpop.f32.mrf.mxu0
    %v2170 = vadd.f32 0.0, %v2169
    %v2171 = vpop.f32.mrf.mxu0
    %v2172 = vadd.f32 0.0, %v2171
    %v2173 = vpop.f32.mrf.mxu0
    %v2174 = vpop.f32.mrf.mxu0
    %2175 = vdwg.mxu0
    %v2176 = vadd.f32 %v1898, %v2129
    %v2177 = vadd.f32 %v1899, %v2131
    %v2178 = vadd.f32 %v1900, %v2170
    %v2179 = vadd.f32 %v1901, %v2172
    %v2180 = vxor.u32 %v2176, 2147483648
    %v2181 = vmul.f32 %v2180, 1.442695
    %v2182 = vpow.pop %v2181
    %v2183 = vadd.f32 %v2182, 1.0
    %v2184 = vrcp.pop %v2183
    %v2185 = vmul.f32 1.0, %v2184
    %v2186 = vxor.u32 %v2177, 2147483648
    %v2187 = vmul.f32 %v2186, 1.442695
    %v2188 = vpow.pop %v2187
    %v2189 = vadd.f32 %v2188, 1.0
    %v2190 = vrcp.pop %v2189
    %v2191 = vmul.f32 1.0, %v2190
    %v2192 = vtanh.pop %v2178
    %v2193 = vxor.u32 %v2179, 2147483648
    %v2194 = vmul.f32 %v2193, 1.442695
    %v2195 = vpow.pop %v2194
    %v2196 = vadd.f32 %v2195, 1.0
    %v2197 = vrcp.pop %v2196
    %v2198 = vmul.f32 1.0, %v2197
    %v2199 = vmul.f32 %v2191, %v1889
    %v2200 = vmul.f32 %v2185, %v2192
    %v2201 = vadd.f32 %v2199, %v2200
    %v2202 = vtanh.pop %v2201
    %v2203 = vmul.f32 %v2198, %v2202
    %v2204 = vpack.c.bf16 %v2203, %v2203
    %s2205 = scalar_lea.vmem [#allocation8], 20
    %2206 = vst [vmem:[%s2205] sm:$0xf] %v2204
    %s2207 = smul.u32 6, 4
    %s2208 = smul.addr %s2207, 8
    %s2209 = scalar_lea.vmem [#allocation2], %s2208
    %v2210 = vld [vmem:[%s2209] sm:$0xff]
    %v2211 = vld [vmem:[%s2209 + $0x8] sm:$0xff]
    %v2212 = vld [vmem:[%s2209 + $0x10] sm:$0xff]
    %v2213 = vld [vmem:[%s2209 + $0x18] sm:$0xff]
    %v2214 = vld [vmem:[#allocation6] sm:$0xff]
    %v2215 = vld [vmem:[#allocation6 + $0x8] sm:$0xff]
    %v2216 = vld [vmem:[#allocation6 + $0x10] sm:$0xff]
    %v2217 = vld [vmem:[#allocation6 + $0x18] sm:$0xff]
    %v2218 = vld [vmem:[#allocation6 + $0x20] sm:$0xff]
    %v2219 = vld [vmem:[#allocation6 + $0x28] sm:$0xff]
    %v2220 = vld [vmem:[#allocation6 + $0x30] sm:$0xff]
    %v2221 = vld [vmem:[#allocation6 + $0x38] sm:$0xff]
    %v2222 = vld [vmem:[#allocation6 + $0x40] sm:$0xff]
    %v2223 = vld [vmem:[#allocation6 + $0x48] sm:$0xff]
    %v2224 = vld [vmem:[#allocation6 + $0x50] sm:$0xff]
    %v2225 = vld [vmem:[#allocation6 + $0x58] sm:$0xff]
    %v2226 = vld [vmem:[#allocation6 + $0x60] sm:$0xff]
    %v2227 = vld [vmem:[#allocation6 + $0x68] sm:$0xff]
    %v2228 = vld [vmem:[#allocation6 + $0x70] sm:$0xff]
    %v2229 = vld [vmem:[#allocation6 + $0x78] sm:$0xff]
    %v2230 = vld [vmem:[#allocation6 + $0x80] sm:$0xff]
    %v2231 = vld [vmem:[#allocation6 + $0x88] sm:$0xff]
    %v2232 = vld [vmem:[#allocation6 + $0x90] sm:$0xff]
    %v2233 = vld [vmem:[#allocation6 + $0x98] sm:$0xff]
    %v2234 = vld [vmem:[#allocation6 + $0xa0] sm:$0xff]
    %v2235 = vld [vmem:[#allocation6 + $0xa8] sm:$0xff]
    %v2236 = vld [vmem:[#allocation6 + $0xb0] sm:$0xff]
    %v2237 = vld [vmem:[#allocation6 + $0xb8] sm:$0xff]
    %v2238 = vld [vmem:[#allocation6 + $0xc0] sm:$0xff]
    %v2239 = vld [vmem:[#allocation6 + $0xc8] sm:$0xff]
    %v2240 = vld [vmem:[#allocation6 + $0xd0] sm:$0xff]
    %v2241 = vld [vmem:[#allocation6 + $0xd8] sm:$0xff]
    %v2242 = vld [vmem:[#allocation6 + $0xe0] sm:$0xff]
    %v2243 = vld [vmem:[#allocation6 + $0xe8] sm:$0xff]
    %v2244 = vld [vmem:[#allocation6 + $0xf0] sm:$0xff]
    %v2245 = vld [vmem:[#allocation6 + $0xf8] sm:$0xff]
    %v2278 = vunpack.c.l.b16 %v2214
    %v2279 = vunpack.c.h.b16 %v2214
    %v2280 = vunpack.c.l.b16 %v2215
    %v2281 = vunpack.c.h.b16 %v2215
    %v2282 = vunpack.c.l.b16 %v2216
    %v2283 = vunpack.c.h.b16 %v2216
    %v2284 = vunpack.c.l.b16 %v2217
    %v2285 = vunpack.c.h.b16 %v2217
    %v2286 = vunpack.c.l.b16 %v2218
    %v2287 = vunpack.c.h.b16 %v2218
    %v2288 = vunpack.c.l.b16 %v2219
    %v2289 = vunpack.c.h.b16 %v2219
    %v2290 = vunpack.c.l.b16 %v2220
    %v2291 = vunpack.c.h.b16 %v2220
    %v2292 = vunpack.c.l.b16 %v2221
    %v2293 = vunpack.c.h.b16 %v2221
    %v2294 = vunpack.c.l.b16 %v2222
    %v2295 = vunpack.c.h.b16 %v2222
    %v2296 = vunpack.c.l.b16 %v2223
    %v2297 = vunpack.c.h.b16 %v2223
    %v2298 = vunpack.c.l.b16 %v2224
    %v2299 = vunpack.c.h.b16 %v2224
    %v2300 = vunpack.c.l.b16 %v2225
    %v2301 = vunpack.c.h.b16 %v2225
    %v2302 = vunpack.c.l.b16 %v2226
    %v2303 = vunpack.c.h.b16 %v2226
    %v2304 = vunpack.c.l.b16 %v2227
    %v2305 = vunpack.c.h.b16 %v2227
    %v2306 = vunpack.c.l.b16 %v2228
    %v2307 = vunpack.c.h.b16 %v2228
    %v2308 = vunpack.c.l.b16 %v2229
    %v2309 = vunpack.c.h.b16 %v2229
    %v2310 = vunpack.c.l.b16 %v2230
    %v2311 = vunpack.c.h.b16 %v2230
    %v2312 = vunpack.c.l.b16 %v2231
    %v2313 = vunpack.c.h.b16 %v2231
    %v2314 = vunpack.c.l.b16 %v2232
    %v2315 = vunpack.c.h.b16 %v2232
    %v2316 = vunpack.c.l.b16 %v2233
    %v2317 = vunpack.c.h.b16 %v2233
    %v2318 = vunpack.c.l.b16 %v2234
    %v2319 = vunpack.c.h.b16 %v2234
    %v2320 = vunpack.c.l.b16 %v2235
    %v2321 = vunpack.c.h.b16 %v2235
    %v2322 = vunpack.c.l.b16 %v2236
    %v2323 = vunpack.c.h.b16 %v2236
    %v2324 = vunpack.c.l.b16 %v2237
    %v2325 = vunpack.c.h.b16 %v2237
    %v2326 = vunpack.c.l.b16 %v2238
    %v2327 = vunpack.c.h.b16 %v2238
    %v2328 = vunpack.c.l.b16 %v2239
    %v2329 = vunpack.c.h.b16 %v2239
    %v2330 = vunpack.c.l.b16 %v2240
    %v2331 = vunpack.c.h.b16 %v2240
    %v2332 = vunpack.c.l.b16 %v2241
    %v2333 = vunpack.c.h.b16 %v2241
    %v2334 = vunpack.c.l.b16 %v2242
    %v2335 = vunpack.c.h.b16 %v2242
    %v2336 = vunpack.c.l.b16 %v2243
    %v2337 = vunpack.c.h.b16 %v2243
    %v2338 = vunpack.c.l.b16 %v2244
    %v2339 = vunpack.c.h.b16 %v2244
    %v2340 = vunpack.c.l.b16 %v2245
    %v2341 = vunpack.c.h.b16 %v2245
    %v2342 = vpack.c.b16 %v2282, %v2278
    %v2343 = vpack.c.b16 %v2283, %v2279
    %v2344 = vpack.c.b16 %v2284, %v2280
    %v2345 = vpack.c.b16 %v2285, %v2281
    %v2346 = vpack.c.b16 %v2290, %v2286
    %v2347 = vpack.c.b16 %v2291, %v2287
    %v2348 = vpack.c.b16 %v2292, %v2288
    %v2349 = vpack.c.b16 %v2293, %v2289
    %v2350 = vpack.c.b16 %v2298, %v2294
    %v2351 = vpack.c.b16 %v2299, %v2295
    %v2352 = vpack.c.b16 %v2300, %v2296
    %v2353 = vpack.c.b16 %v2301, %v2297
    %v2354 = vpack.c.b16 %v2306, %v2302
    %v2355 = vpack.c.b16 %v2307, %v2303
    %v2356 = vpack.c.b16 %v2308, %v2304
    %v2357 = vpack.c.b16 %v2309, %v2305
    %v2358 = vpack.c.b16 %v2314, %v2310
    %v2359 = vpack.c.b16 %v2315, %v2311
    %v2360 = vpack.c.b16 %v2316, %v2312
    %v2361 = vpack.c.b16 %v2317, %v2313
    %v2362 = vpack.c.b16 %v2322, %v2318
    %v2363 = vpack.c.b16 %v2323, %v2319
    %v2364 = vpack.c.b16 %v2324, %v2320
    %v2365 = vpack.c.b16 %v2325, %v2321
    %v2366 = vpack.c.b16 %v2330, %v2326
    %v2367 = vpack.c.b16 %v2331, %v2327
    %v2368 = vpack.c.b16 %v2332, %v2328
    %v2369 = vpack.c.b16 %v2333, %v2329
    %v2370 = vpack.c.b16 %v2338, %v2334
    %v2371 = vpack.c.b16 %v2339, %v2335
    %v2372 = vpack.c.b16 %v2340, %v2336
    %v2373 = vpack.c.b16 %v2341, %v2337
    %2406 = vmatprep.subr.bf16.mxu0 %v2371
    %2407 = vmatpush1.bf16.msra.mxu0 %v2370
    %2408 = vmatprep.subr.bf16.mxu0 %v2367
    %2409 = vmatpush1.bf16.msra.mxu0 %v2366
    %2410 = vmatprep.subr.bf16.mxu0 %v2363
    %2411 = vmatpush1.bf16.msra.mxu0 %v2362
    %2412 = vmatprep.subr.bf16.mxu0 %v2359
    %2413 = vmatpush1.bf16.msra.mxu0 %v2358
    %2414 = vmatprep.subr.bf16.mxu0 %v2355
    %2415 = vmatpush1.bf16.msra.mxu0 %v2354
    %2416 = vmatprep.subr.bf16.mxu0 %v2351
    %2417 = vmatpush1.bf16.msra.mxu0 %v2350
    %2418 = vmatprep.subr.bf16.mxu0 %v2347
    %2419 = vmatpush1.bf16.msra.mxu0 %v2346
    %2420 = vmatprep.subr.bf16.mxu0 %v2343
    %2421 = vmatpush1.bf16.msra.mxu0 %v2342
    %2422 = vmatprep.subr.bf16.mxu0 0
    %2423 = vmatpush2.bf16.msra.mxu0 0
    %2424 = vmatprep.subr.bf16.mxu0 0
    %2425 = vmatpush2.bf16.msra.mxu0 0
    %2426 = vmatprep.subr.bf16.mxu0 0
    %2427 = vmatpush2.bf16.msra.mxu0 0
    %2428 = vmatprep.subr.bf16.mxu0 0
    %2429 = vmatpush2.bf16.msra.mxu0 0
    %2430 = vmatprep.subr.bf16.mxu0 0
    %2431 = vmatpush2.bf16.msra.mxu0 0
    %2432 = vmatprep.subr.bf16.mxu0 0
    %2433 = vmatpush2.bf16.msra.mxu0 0
    %2434 = vmatprep.subr.bf16.mxu0 0
    %2435 = vmatpush2.bf16.msra.mxu0 0
    %2436 = vmatprep.subr.bf16.mxu0 0
    %2437 = vmatpush2.bf16.msra.mxu0 0
    %2438 = vmatprep.mubr.bf16.mxu0 0
    %2439 = vmatmul.mubr.bf16.gmra.mxu0 %v2204
    %v2440 = vpop.f32.mrf.mxu0
    %v2441 = vadd.f32 0.0, %v2440
    %v2442 = vpop.f32.mrf.mxu0
    %v2443 = vadd.f32 0.0, %v2442
    %v2444 = vpop.f32.mrf.mxu0
    %v2445 = vpop.f32.mrf.mxu0
    %2446 = vdwg.mxu0
    %2447 = vmatprep.subr.bf16.mxu0 %v2373
    %2448 = vmatpush1.bf16.msra.mxu0 %v2372
    %2449 = vmatprep.subr.bf16.mxu0 %v2369
    %2450 = vmatpush1.bf16.msra.mxu0 %v2368
    %2451 = vmatprep.subr.bf16.mxu0 %v2365
    %2452 = vmatpush1.bf16.msra.mxu0 %v2364
    %2453 = vmatprep.subr.bf16.mxu0 %v2361
    %2454 = vmatpush1.bf16.msra.mxu0 %v2360
    %2455 = vmatprep.subr.bf16.mxu0 %v2357
    %2456 = vmatpush1.bf16.msra.mxu0 %v2356
    %2457 = vmatprep.subr.bf16.mxu0 %v2353
    %2458 = vmatpush1.bf16.msra.mxu0 %v2352
    %2459 = vmatprep.subr.bf16.mxu0 %v2349
    %2460 = vmatpush1.bf16.msra.mxu0 %v2348
    %2461 = vmatprep.subr.bf16.mxu0 %v2345
    %2462 = vmatpush1.bf16.msra.mxu0 %v2344
    %2463 = vmatprep.subr.bf16.mxu0 0
    %2464 = vmatpush2.bf16.msra.mxu0 0
    %2465 = vmatprep.subr.bf16.mxu0 0
    %2466 = vmatpush2.bf16.msra.mxu0 0
    %2467 = vmatprep.subr.bf16.mxu0 0
    %2468 = vmatpush2.bf16.msra.mxu0 0
    %2469 = vmatprep.subr.bf16.mxu0 0
    %2470 = vmatpush2.bf16.msra.mxu0 0
    %2471 = vmatprep.subr.bf16.mxu0 0
    %2472 = vmatpush2.bf16.msra.mxu0 0
    %2473 = vmatprep.subr.bf16.mxu0 0
    %2474 = vmatpush2.bf16.msra.mxu0 0
    %2475 = vmatprep.subr.bf16.mxu0 0
    %2476 = vmatpush2.bf16.msra.mxu0 0
    %2477 = vmatprep.subr.bf16.mxu0 0
    %2478 = vmatpush2.bf16.msra.mxu0 0
    %2479 = vmatprep.mubr.bf16.mxu0 0
    %2480 = vmatmul.mubr.bf16.gmra.mxu0 %v2204
    %v2481 = vpop.f32.mrf.mxu0
    %v2482 = vadd.f32 0.0, %v2481
    %v2483 = vpop.f32.mrf.mxu0
    %v2484 = vadd.f32 0.0, %v2483
    %v2485 = vpop.f32.mrf.mxu0
    %v2486 = vpop.f32.mrf.mxu0
    %2487 = vdwg.mxu0
    %v2488 = vadd.f32 %v2210, %v2441
    %v2489 = vadd.f32 %v2211, %v2443
    %v2490 = vadd.f32 %v2212, %v2482
    %v2491 = vadd.f32 %v2213, %v2484
    %v2492 = vxor.u32 %v2488, 2147483648
    %v2493 = vmul.f32 %v2492, 1.442695
    %v2494 = vpow.pop %v2493
    %v2495 = vadd.f32 %v2494, 1.0
    %v2496 = vrcp.pop %v2495
    %v2497 = vmul.f32 1.0, %v2496
    %v2498 = vxor.u32 %v2489, 2147483648
    %v2499 = vmul.f32 %v2498, 1.442695
    %v2500 = vpow.pop %v2499
    %v2501 = vadd.f32 %v2500, 1.0
    %v2502 = vrcp.pop %v2501
    %v2503 = vmul.f32 1.0, %v2502
    %v2504 = vtanh.pop %v2490
    %v2505 = vxor.u32 %v2491, 2147483648
    %v2506 = vmul.f32 %v2505, 1.442695
    %v2507 = vpow.pop %v2506
    %v2508 = vadd.f32 %v2507, 1.0
    %v2509 = vrcp.pop %v2508
    %v2510 = vmul.f32 1.0, %v2509
    %v2511 = vmul.f32 %v2503, %v2201
    %v2512 = vmul.f32 %v2497, %v2504
    %v2513 = vadd.f32 %v2511, %v2512
    %v2514 = vtanh.pop %v2513
    %v2515 = vmul.f32 %v2510, %v2514
    %v2516 = vpack.c.bf16 %v2515, %v2515
    %s2517 = scalar_lea.vmem [#allocation8], 24
    %2518 = vst [vmem:[%s2517] sm:$0xf] %v2516
    %s2519 = smul.u32 7, 4
    %s2520 = smul.addr %s2519, 8
    %s2521 = scalar_lea.vmem [#allocation2], %s2520
    %v2522 = vld [vmem:[%s2521] sm:$0xff]
    %v2523 = vld [vmem:[%s2521 + $0x8] sm:$0xff]
    %v2524 = vld [vmem:[%s2521 + $0x10] sm:$0xff]
    %v2525 = vld [vmem:[%s2521 + $0x18] sm:$0xff]
    %v2526 = vld [vmem:[#allocation6] sm:$0xff]
    %v2527 = vld [vmem:[#allocation6 + $0x8] sm:$0xff]
    %v2528 = vld [vmem:[#allocation6 + $0x10] sm:$0xff]
    %v2529 = vld [vmem:[#allocation6 + $0x18] sm:$0xff]
    %v2530 = vld [vmem:[#allocation6 + $0x20] sm:$0xff]
    %v2531 = vld [vmem:[#allocation6 + $0x28] sm:$0xff]
    %v2532 = vld [vmem:[#allocation6 + $0x30] sm:$0xff]
    %v2533 = vld [vmem:[#allocation6 + $0x38] sm:$0xff]
    %v2534 = vld [vmem:[#allocation6 + $0x40] sm:$0xff]
    %v2535 = vld [vmem:[#allocation6 + $0x48] sm:$0xff]
    %v2536 = vld [vmem:[#allocation6 + $0x50] sm:$0xff]
    %v2537 = vld [vmem:[#allocation6 + $0x58] sm:$0xff]
    %v2538 = vld [vmem:[#allocation6 + $0x60] sm:$0xff]
    %v2539 = vld [vmem:[#allocation6 + $0x68] sm:$0xff]
    %v2540 = vld [vmem:[#allocation6 + $0x70] sm:$0xff]
    %v2541 = vld [vmem:[#allocation6 + $0x78] sm:$0xff]
    %v2542 = vld [vmem:[#allocation6 + $0x80] sm:$0xff]
    %v2543 = vld [vmem:[#allocation6 + $0x88] sm:$0xff]
    %v2544 = vld [vmem:[#allocation6 + $0x90] sm:$0xff]
    %v2545 = vld [vmem:[#allocation6 + $0x98] sm:$0xff]
    %v2546 = vld [vmem:[#allocation6 + $0xa0] sm:$0xff]
    %v2547 = vld [vmem:[#allocation6 + $0xa8] sm:$0xff]
    %v2548 = vld [vmem:[#allocation6 + $0xb0] sm:$0xff]
    %v2549 = vld [vmem:[#allocation6 + $0xb8] sm:$0xff]
    %v2550 = vld [vmem:[#allocation6 + $0xc0] sm:$0xff]
    %v2551 = vld [vmem:[#allocation6 + $0xc8] sm:$0xff]
    %v2552 = vld [vmem:[#allocation6 + $0xd0] sm:$0xff]
    %v2553 = vld [vmem:[#allocation6 + $0xd8] sm:$0xff]
    %v2554 = vld [vmem:[#allocation6 + $0xe0] sm:$0xff]
    %v2555 = vld [vmem:[#allocation6 + $0xe8] sm:$0xff]
    %v2556 = vld [vmem:[#allocation6 + $0xf0] sm:$0xff]
    %v2557 = vld [vmem:[#allocation6 + $0xf8] sm:$0xff]
    %v2590 = vunpack.c.l.b16 %v2526
    %v2591 = vunpack.c.h.b16 %v2526
    %v2592 = vunpack.c.l.b16 %v2527
    %v2593 = vunpack.c.h.b16 %v2527
    %v2594 = vunpack.c.l.b16 %v2528
    %v2595 = vunpack.c.h.b16 %v2528
    %v2596 = vunpack.c.l.b16 %v2529
    %v2597 = vunpack.c.h.b16 %v2529
    %v2598 = vunpack.c.l.b16 %v2530
    %v2599 = vunpack.c.h.b16 %v2530
    %v2600 = vunpack.c.l.b16 %v2531
    %v2601 = vunpack.c.h.b16 %v2531
    %v2602 = vunpack.c.l.b16 %v2532
    %v2603 = vunpack.c.h.b16 %v2532
    %v2604 = vunpack.c.l.b16 %v2533
    %v2605 = vunpack.c.h.b16 %v2533
    %v2606 = vunpack.c.l.b16 %v2534
    %v2607 = vunpack.c.h.b16 %v2534
    %v2608 = vunpack.c.l.b16 %v2535
    %v2609 = vunpack.c.h.b16 %v2535
    %v2610 = vunpack.c.l.b16 %v2536
    %v2611 = vunpack.c.h.b16 %v2536
    %v2612 = vunpack.c.l.b16 %v2537
    %v2613 = vunpack.c.h.b16 %v2537
    %v2614 = vunpack.c.l.b16 %v2538
    %v2615 = vunpack.c.h.b16 %v2538
    %v2616 = vunpack.c.l.b16 %v2539
    %v2617 = vunpack.c.h.b16 %v2539
    %v2618 = vunpack.c.l.b16 %v2540
    %v2619 = vunpack.c.h.b16 %v2540
    %v2620 = vunpack.c.l.b16 %v2541
    %v2621 = vunpack.c.h.b16 %v2541
    %v2622 = vunpack.c.l.b16 %v2542
    %v2623 = vunpack.c.h.b16 %v2542
    %v2624 = vunpack.c.l.b16 %v2543
    %v2625 = vunpack.c.h.b16 %v2543
    %v2626 = vunpack.c.l.b16 %v2544
    %v2627 = vunpack.c.h.b16 %v2544
    %v2628 = vunpack.c.l.b16 %v2545
    %v2629 = vunpack.c.h.b16 %v2545
    %v2630 = vunpack.c.l.b16 %v2546
    %v2631 = vunpack.c.h.b16 %v2546
    %v2632 = vunpack.c.l.b16 %v2547
    %v2633 = vunpack.c.h.b16 %v2547
    %v2634 = vunpack.c.l.b16 %v2548
    %v2635 = vunpack.c.h.b16 %v2548
    %v2636 = vunpack.c.l.b16 %v2549
    %v2637 = vunpack.c.h.b16 %v2549
    %v2638 = vunpack.c.l.b16 %v2550
    %v2639 = vunpack.c.h.b16 %v2550
    %v2640 = vunpack.c.l.b16 %v2551
    %v2641 = vunpack.c.h.b16 %v2551
    %v2642 = vunpack.c.l.b16 %v2552
    %v2643 = vunpack.c.h.b16 %v2552
    %v2644 = vunpack.c.l.b16 %v2553
    %v2645 = vunpack.c.h.b16 %v2553
    %v2646 = vunpack.c.l.b16 %v2554
    %v2647 = vunpack.c.h.b16 %v2554
    %v2648 = vunpack.c.l.b16 %v2555
    %v2649 = vunpack.c.h.b16 %v2555
    %v2650 = vunpack.c.l.b16 %v2556
    %v2651 = vunpack.c.h.b16 %v2556
    %v2652 = vunpack.c.l.b16 %v2557
    %v2653 = vunpack.c.h.b16 %v2557
    %v2654 = vpack.c.b16 %v2594, %v2590
    %v2655 = vpack.c.b16 %v2595, %v2591
    %v2656 = vpack.c.b16 %v2596, %v2592
    %v2657 = vpack.c.b16 %v2597, %v2593
    %v2658 = vpack.c.b16 %v2602, %v2598
    %v2659 = vpack.c.b16 %v2603, %v2599
    %v2660 = vpack.c.b16 %v2604, %v2600
    %v2661 = vpack.c.b16 %v2605, %v2601
    %v2662 = vpack.c.b16 %v2610, %v2606
    %v2663 = vpack.c.b16 %v2611, %v2607
    %v2664 = vpack.c.b16 %v2612, %v2608
    %v2665 = vpack.c.b16 %v2613, %v2609
    %v2666 = vpack.c.b16 %v2618, %v2614
    %v2667 = vpack.c.b16 %v2619, %v2615
    %v2668 = vpack.c.b16 %v2620, %v2616
    %v2669 = vpack.c.b16 %v2621, %v2617
    %v2670 = vpack.c.b16 %v2626, %v2622
    %v2671 = vpack.c.b16 %v2627, %v2623
    %v2672 = vpack.c.b16 %v2628, %v2624
    %v2673 = vpack.c.b16 %v2629, %v2625
    %v2674 = vpack.c.b16 %v2634, %v2630
    %v2675 = vpack.c.b16 %v2635, %v2631
    %v2676 = vpack.c.b16 %v2636, %v2632
    %v2677 = vpack.c.b16 %v2637, %v2633
    %v2678 = vpack.c.b16 %v2642, %v2638
    %v2679 = vpack.c.b16 %v2643, %v2639
    %v2680 = vpack.c.b16 %v2644, %v2640
    %v2681 = vpack.c.b16 %v2645, %v2641
    %v2682 = vpack.c.b16 %v2650, %v2646
    %v2683 = vpack.c.b16 %v2651, %v2647
    %v2684 = vpack.c.b16 %v2652, %v2648
    %v2685 = vpack.c.b16 %v2653, %v2649
    %2718 = vmatprep.subr.bf16.mxu0 %v2683
    %2719 = vmatpush1.bf16.msra.mxu0 %v2682
    %2720 = vmatprep.subr.bf16.mxu0 %v2679
    %2721 = vmatpush1.bf16.msra.mxu0 %v2678
    %2722 = vmatprep.subr.bf16.mxu0 %v2675
    %2723 = vmatpush1.bf16.msra.mxu0 %v2674
    %2724 = vmatprep.subr.bf16.mxu0 %v2671
    %2725 = vmatpush1.bf16.msra.mxu0 %v2670
    %2726 = vmatprep.subr.bf16.mxu0 %v2667
    %2727 = vmatpush1.bf16.msra.mxu0 %v2666
    %2728 = vmatprep.subr.bf16.mxu0 %v2663
    %2729 = vmatpush1.bf16.msra.mxu0 %v2662
    %2730 = vmatprep.subr.bf16.mxu0 %v2659
    %2731 = vmatpush1.bf16.msra.mxu0 %v2658
    %2732 = vmatprep.subr.bf16.mxu0 %v2655
    %2733 = vmatpush1.bf16.msra.mxu0 %v2654
    %2734 = vmatprep.subr.bf16.mxu0 0
    %2735 = vmatpush2.bf16.msra.mxu0 0
    %2736 = vmatprep.subr.bf16.mxu0 0
    %2737 = vmatpush2.bf16.msra.mxu0 0
    %2738 = vmatprep.subr.bf16.mxu0 0
    %2739 = vmatpush2.bf16.msra.mxu0 0
    %2740 = vmatprep.subr.bf16.mxu0 0
    %2741 = vmatpush2.bf16.msra.mxu0 0
    %2742 = vmatprep.subr.bf16.mxu0 0
    %2743 = vmatpush2.bf16.msra.mxu0 0
    %2744 = vmatprep.subr.bf16.mxu0 0
    %2745 = vmatpush2.bf16.msra.mxu0 0
    %2746 = vmatprep.subr.bf16.mxu0 0
    %2747 = vmatpush2.bf16.msra.mxu0 0
    %2748 = vmatprep.subr.bf16.mxu0 0
    %2749 = vmatpush2.bf16.msra.mxu0 0
    %2750 = vmatprep.mubr.bf16.mxu0 0
    %2751 = vmatmul.mubr.bf16.gmra.mxu0 %v2516
    %v2752 = vpop.f32.mrf.mxu0
    %v2753 = vadd.f32 0.0, %v2752
    %v2754 = vpop.f32.mrf.mxu0
    %v2755 = vadd.f32 0.0, %v2754
    %v2756 = vpop.f32.mrf.mxu0
    %v2757 = vpop.f32.mrf.mxu0
    %2758 = vdwg.mxu0
    %2759 = vmatprep.subr.bf16.mxu0 %v2685
    %2760 = vmatpush1.bf16.msra.mxu0 %v2684
    %2761 = vmatprep.subr.bf16.mxu0 %v2681
    %2762 = vmatpush1.bf16.msra.mxu0 %v2680
    %2763 = vmatprep.subr.bf16.mxu0 %v2677
    %2764 = vmatpush1.bf16.msra.mxu0 %v2676
    %2765 = vmatprep.subr.bf16.mxu0 %v2673
    %2766 = vmatpush1.bf16.msra.mxu0 %v2672
    %2767 = vmatprep.subr.bf16.mxu0 %v2669
    %2768 = vmatpush1.bf16.msra.mxu0 %v2668
    %2769 = vmatprep.subr.bf16.mxu0 %v2665
    %2770 = vmatpush1.bf16.msra.mxu0 %v2664
    %2771 = vmatprep.subr.bf16.mxu0 %v2661
    %2772 = vmatpush1.bf16.msra.mxu0 %v2660
    %2773 = vmatprep.subr.bf16.mxu0 %v2657
    %2774 = vmatpush1.bf16.msra.mxu0 %v2656
    %2775 = vmatprep.subr.bf16.mxu0 0
    %2776 = vmatpush2.bf16.msra.mxu0 0
    %2777 = vmatprep.subr.bf16.mxu0 0
    %2778 = vmatpush2.bf16.msra.mxu0 0
    %2779 = vmatprep.subr.bf16.mxu0 0
    %2780 = vmatpush2.bf16.msra.mxu0 0
    %2781 = vmatprep.subr.bf16.mxu0 0
    %2782 = vmatpush2.bf16.msra.mxu0 0
    %2783 = vmatprep.subr.bf16.mxu0 0
    %2784 = vmatpush2.bf16.msra.mxu0 0
    %2785 = vmatprep.subr.bf16.mxu0 0
    %2786 = vmatpush2.bf16.msra.mxu0 0
    %2787 = vmatprep.subr.bf16.mxu0 0
    %2788 = vmatpush2.bf16.msra.mxu0 0
    %2789 = vmatprep.subr.bf16.mxu0 0
    %2790 = vmatpush2.bf16.msra.mxu0 0
    %2791 = vmatprep.mubr.bf16.mxu0 0
    %2792 = vmatmul.mubr.bf16.gmra.mxu0 %v2516
    %v2793 = vpop.f32.mrf.mxu0
    %v2794 = vadd.f32 0.0, %v2793
    %v2795 = vpop.f32.mrf.mxu0
    %v2796 = vadd.f32 0.0, %v2795
    %v2797 = vpop.f32.mrf.mxu0
    %v2798 = vpop.f32.mrf.mxu0
    %2799 = vdwg.mxu0
    %v2800 = vadd.f32 %v2522, %v2753
    %v2801 = vadd.f32 %v2523, %v2755
    %v2802 = vadd.f32 %v2524, %v2794
    %v2803 = vadd.f32 %v2525, %v2796
    %v2804 = vxor.u32 %v2800, 2147483648
    %v2805 = vmul.f32 %v2804, 1.442695
    %v2806 = vpow.pop %v2805
    %v2807 = vadd.f32 %v2806, 1.0
    %v2808 = vrcp.pop %v2807
    %v2809 = vmul.f32 1.0, %v2808
    %v2810 = vxor.u32 %v2801, 2147483648
    %v2811 = vmul.f32 %v2810, 1.442695
    %v2812 = vpow.pop %v2811
    %v2813 = vadd.f32 %v2812, 1.0
    %v2814 = vrcp.pop %v2813
    %v2815 = vmul.f32 1.0, %v2814
    %v2816 = vtanh.pop %v2802
    %v2817 = vxor.u32 %v2803, 2147483648
    %v2818 = vmul.f32 %v2817, 1.442695
    %v2819 = vpow.pop %v2818
    %v2820 = vadd.f32 %v2819, 1.0
    %v2821 = vrcp.pop %v2820
    %v2822 = vmul.f32 1.0, %v2821
    %v2823 = vmul.f32 %v2815, %v2513
    %v2824 = vmul.f32 %v2809, %v2816
    %v2825 = vadd.f32 %v2823, %v2824
    %v2826 = vtanh.pop %v2825
    %v2827 = vmul.f32 %v2822, %v2826
    %v2828 = vpack.c.bf16 %v2827, %v2827
    %s2829 = scalar_lea.vmem [#allocation8], 28
    %2830 = vst [vmem:[%s2829] sm:$0xf] %v2828
    // Predicated region
    $region26: #{tpu_custom_call.1} parent=1 // pred_check
      _
    $region27: #{tpu_custom_call.1} parent=1 // pred_check_branch
      %2832 = sbr.rel (0) target = $region29
    $region28: #{tpu_custom_call.1} parent=1 // pred_region
      %s2834 = ssub.s32 512, 512
      %2835 = vsyncadd [#allocation5], %s2834
      %s2836 = sshll.u32 [#allocation8], 4
      %s2837 = int_to_ptr.vmem [resolvable:$true] %s2836
      %2842 = dma.vmem_to_hbm [thread:$0]  %s2837, 512, %s4, [#allocation5], 64, 64, 4
    $region29: #{tpu_custom_call.1} parent=1 // pred_fallthru
      _
    // Predicated region
    $region30: #{tpu_custom_call.1} parent=1 // pred_check
      _
    $region31: #{tpu_custom_call.1} parent=1 // pred_check_branch
      %2844 = sbr.rel (0) target = $region33
    $region32: #{tpu_custom_call.1} parent=1 // pred_region
      %2845 = dma.done [#allocation5], 512
    $region33: #{tpu_custom_call.1} parent=1 // pred_fallthru
      _
    %2846 = vsyncpa [#allocation4], 1
    %2847 = vsyncpa [#allocation7], 1
    %2848 = vsyncpa [#allocation5], 1

</llo_original>
